<compile_context>
chip_gen: v5e
topology: v5e:2x2
jax: 0.10.0
libtpu: 0.0.40
codegen_flags: <defaults>
</compile_context>

<pallas_src>
import functools

import jax
import jax.numpy as jnp
from jax.experimental import pallas as pl
from jax.experimental.pallas import tpu as pltpu


# --------------------------------------------------------------------------
# Pallas kernel: the whole sequence in one invocation.
# --------------------------------------------------------------------------
def lstm_seq_kernel(
    x_ref, h0_ref, c0_ref,                 # (T,I) inputs, (2,H) initial hidden/state
    wih1_ref, whh1_ref, b1_ref,            # LSTMCell 1: x-proj / recurrent / fused bias
    win2_ref, whh2_ref, b2_ref,            # LSTMCell 2 with mid Linear folded in
    wfin_ref, bfin_ref,                    # final Linear
    out_ref, hcat_ref, ccat_ref,           # (T,O) log-probs, final (2,H) hidden/state
):
    T = x_ref.shape[0]
    H = hcat_ref.shape[1]

    # Hoisted non-recurrent input projection for the whole sequence:
    # one (T,I)x(I,4H) MXU push instead of T pushes with M=1.
    xproj = (
        jnp.dot(x_ref[...], wih1_ref[...], preferred_element_type=jnp.float32)
        + b1_ref[...]
    )

    whh1 = whh1_ref[...]
    win2 = win2_ref[...]
    whh2 = whh2_ref[...]
    b2 = b2_ref[...]
    wfin = wfin_ref[...]
    bfin = bfin_ref[...]

    # PyTorch forward: hidden1 = hidden[1:], hidden2 = hidden[:1] (same for state).
    h1 = h0_ref[1:2, :]
    c1 = c0_ref[1:2, :]
    h2 = h0_ref[0:1, :]
    c2 = c0_ref[0:1, :]

    def gate_math(gates, c):
        # Full-width sigmoid/tanh over the (1, 4H) vreg (EUP slot), slice after.
        sig = jax.nn.sigmoid(gates)
        tnh = jnp.tanh(gates)
        i_g = sig[:, 0 * H:1 * H]
        f_g = sig[:, 1 * H:2 * H]
        g_g = tnh[:, 2 * H:3 * H]
        o_g = sig[:, 3 * H:4 * H]
        c_new = f_g * c + i_g * g_g
        h_new = o_g * jnp.tanh(c_new)
        return h_new, c_new

    # Fully-unrolled static recurrence; h/c live in vregs the whole time.
    h1n = h2n = c1n = c2n = None
    for t in range(T):
        # --- LSTM cell 1 (only the recurrent matmul remains per step) ------
        g1 = xproj[t:t + 1, :] + jnp.dot(
            h1, whh1, preferred_element_type=jnp.float32)
        h1n, c1n = gate_math(g1, c1)

        # --- LSTM cell 2 (mid Linear folded into win2 / b2) ----------------
        g2 = (
            jnp.dot(c1n, win2, preferred_element_type=jnp.float32)
            + jnp.dot(h2, whh2, preferred_element_type=jnp.float32)
            + b2
        )
        h2n, c2n = gate_math(g2, c2)

        # --- final Linear (fed with cell-2's state) + LogSoftmax(dim=1) ----
        final = jnp.dot(c2n, wfin, preferred_element_type=jnp.float32) + bfin
        # dropout: identity (eval mode) -- see TODO(synk) above.
        m = jnp.max(final, axis=1, keepdims=True)
        lse = m + jnp.log(jnp.sum(jnp.exp(final - m), axis=1, keepdims=True))
        out_ref[t:t + 1, :] = final - lse

        # Returned hidden is cat((hidden1, hidden2)) = [h1n; h2n]; the next
        # forward() call reads hidden[1:] into cell 1 and hidden[:1] into
        # cell 2, i.e. the roles swap every step.
        h1, c1, h2, c2 = h2n, c2n, h1n, c1n

    # Final cat((hidden1, hidden2)) / cat((state1, state2)) of the last step.
    hcat_ref[0:1, :] = h1n
    hcat_ref[1:2, :] = h2n
    ccat_ref[0:1, :] = c1n
    ccat_ref[1:2, :] = c2n


# --------------------------------------------------------------------------
# Wrapper: parameter fusing/transposing (constant-folded under jit) and the
# pallas_call setup (single invocation, everything resident in VMEM).
# --------------------------------------------------------------------------
def lstm_forward_seq(x_seq, hidden, state, params):
    """Run T chained forward() steps in one pallas_call.

    x_seq:  (T, input_size) float32
    hidden: (2, hidden_size) float32  (initial)
    state:  (2, hidden_size) float32  (initial)
    Returns (out_seq (T, output_size), hidden_final (2, H), state_final (2, H)).
    """
    T, I = x_seq.shape
    H = hidden.shape[1]
    O = params["w_final"].shape[0]

    # LSTM cell 1: keep x-projection and recurrent matmuls separate so the
    # x-projection can be hoisted over the whole sequence inside the kernel.
    wih1 = params["w_ih1"].T                                   # (I, 4H)
    whh1 = params["w_hh1"].T                                   # (H, 4H)
    b1 = (params["b_ih1"] + params["b_hh1"]).reshape(1, 4 * H)

    # Fold mid Linear into LSTM cell 2's input path:
    #   mid = c1 @ w_mid.T + b_mid
    #   gates2 = mid @ w_ih2.T + ...  ==  c1 @ (w_mid.T @ w_ih2.T) + ...
    win2 = params["w_mid"].T @ params["w_ih2"].T               # (H, 4H)
    whh2 = params["w_hh2"].T                                   # (H, 4H)
    b2 = (
        params["b_mid"] @ params["w_ih2"].T
        + params["b_ih2"] + params["b_hh2"]
    ).reshape(1, 4 * H)

    wfin = params["w_final"].T                                 # (H, O)
    bfin = params["b_final"].reshape(1, O)

    vmem = pl.BlockSpec(memory_space=pltpu.MemorySpace.VMEM)
    out_shape = (
        jax.ShapeDtypeStruct((T, O), jnp.float32),
        jax.ShapeDtypeStruct((2, H), jnp.float32),
        jax.ShapeDtypeStruct((2, H), jnp.float32),
    )

    out_seq, hcat, ccat = pl.pallas_call(
        lstm_seq_kernel,
        in_specs=[vmem] * 11,
        out_specs=(vmem, vmem, vmem),
        out_shape=out_shape,
    )(x_seq, hidden, state, wih1, whh1, b1, win2, whh2, b2, wfin, bfin)

    return out_seq, hcat, ccat


def lstm_forward(x, hidden, state, params):
    """Single module forward() step (== the sequence kernel with T = 1)."""
    out, hcat, ccat = lstm_forward_seq(x, hidden, state, params)
    return out, hcat, ccat


# --------------------------------------------------------------------------
# Deterministic parameter init (matches PyTorch shapes: LSTMCell / Linear).
# --------------------------------------------------------------------------
def init_params(key, input_size, hidden_size, output_size):
    H, I, O = hidden_size, input_size, output_size
    keys = jax.random.split(key, 12)
    u = lambda k, shape, bound: jax.random.uniform(
        k, shape, jnp.float32, minval=-bound, maxval=bound)
    b_lstm = 1.0 / jnp.sqrt(H)
    return {
        "w_ih1": u(keys[0], (4 * H, I), b_lstm),
        "w_hh1": u(keys[1], (4 * H, H), b_lstm),
        "b_ih1": u(keys[2], (4 * H,), b_lstm),
        "b_hh1": u(keys[3], (4 * H,), b_lstm),
        "w_mid": u(keys[4], (H, H), 1.0 / jnp.sqrt(H)),
        "b_mid": u(keys[5], (H,), 1.0 / jnp.sqrt(H)),
        "w_ih2": u(keys[6], (4 * H, H), b_lstm),
        "w_hh2": u(keys[7], (4 * H, H), b_lstm),
        "b_ih2": u(keys[8], (4 * H,), b_lstm),
        "b_hh2": u(keys[9], (4 * H,), b_lstm),
        "w_final": u(keys[10], (O, H), 1.0 / jnp.sqrt(H)),
        "b_final": u(keys[11], (O,), 1.0 / jnp.sqrt(H)),
    }


# --------------------------------------------------------------------------
# Pure-JAX reference (mirrors the PyTorch math exactly, no weight folding).
# --------------------------------------------------------------------------
def lstm_step_ref(x, hidden, state, params):
    H = hidden.shape[1]

    def cell(inp, h, c, w_ih, w_hh, b_ih, b_hh):
        gates = inp @ w_ih.T + b_ih + h @ w_hh.T + b_hh
        i = jax.nn.sigmoid(gates[:, 0 * H:1 * H])
        f = jax.nn.sigmoid(gates[:, 1 * H:2 * H])
        g = jnp.tanh(gates[:, 2 * H:3 * H])
        o = jax.nn.sigmoid(gates[:, 3 * H:4 * H])
        c_new = f * c + i * g
        return o * jnp.tanh(c_new), c_new

    h1, c1 = hidden[1:2], state[1:2]
    h2, c2 = hidden[0:1], state[0:1]
    h1n, c1n = cell(x, h1, c1, params["w_ih1"], params["w_hh1"],
                    params["b_ih1"], params["b_hh1"])
    mid = c1n @ params["w_mid"].T + params["b_mid"]
    h2n, c2n = cell(mid, h2, c2, params["w_ih2"], params["w_hh2"],
                    params["b_ih2"], params["b_hh2"])
    final = c2n @ params["w_final"].T + params["b_final"]
    out = final - jax.scipy.special.logsumexp(final, axis=1, keepdims=True)
    return out, jnp.concatenate([h1n, h2n], 0), jnp.concatenate([c1n, c2n], 0)


def lstm_seq_ref(x_seq, hidden, state, params):
    outs = []
    for t in range(x_seq.shape[0]):
        out, hidden, state = lstm_step_ref(x_seq[t:t + 1], hidden, state, params)
        outs.append(out)
    return jnp.concatenate(outs, axis=0), hidden, state


if __name__ == "__main__":
    INPUT_SIZE, HIDDEN_SIZE, OUTPUT_SIZE, SEQ_LEN = 16, 32, 16, 8

    key = jax.random.PRNGKey(0)
    k_param, k_x = jax.random.split(key)
    params = init_params(k_param, INPUT_SIZE, HIDDEN_SIZE, OUTPUT_SIZE)

    x_seq = jax.random.normal(k_x, (SEQ_LEN, INPUT_SIZE), jnp.float32)
    hidden = jnp.zeros((2, HIDDEN_SIZE), jnp.float32)    # initHidden()
    state = jnp.zeros((2, HIDDEN_SIZE), jnp.float32)     # initHidden()

    # --- full sequence in one kernel launch -------------------------------
    fwd_seq = jax.jit(functools.partial(lstm_forward_seq, params=params))
    out, h_cat, c_cat = fwd_seq(x_seq, hidden, state)
    jax.block_until_ready((out, h_cat, c_cat))

    out_r, h_r, c_r = lstm_seq_ref(x_seq, hidden, state, params)
    assert out.shape == (SEQ_LEN, OUTPUT_SIZE)
    assert h_cat.shape == (2, HIDDEN_SIZE) and c_cat.shape == (2, HIDDEN_SIZE)
    assert jnp.allclose(out, out_r, atol=1e-3, rtol=1e-3)
    assert jnp.allclose(h_cat, h_r, atol=1e-3, rtol=1e-3)
    assert jnp.allclose(c_cat, c_r, atol=1e-3, rtol=1e-3)

    # --- single step (exactly the module's forward()) ----------------------
    fwd1 = jax.jit(functools.partial(lstm_forward, params=params))
    out1, h1c, c1c = fwd1(x_seq[:1], hidden, state)
    jax.block_until_ready((out1, h1c, c1c))
    out1_r, h1_r, c1_r = lstm_step_ref(x_seq[:1], hidden, state, params)
    assert jnp.allclose(out1, out1_r, atol=1e-3, rtol=1e-3)
    assert jnp.allclose(h1c, h1_r, atol=1e-3, rtol=1e-3)
    assert jnp.allclose(c1c, c1_r, atol=1e-3, rtol=1e-3)

    print("KERNEL_OK")
</pallas_src>

<mosaic_0001>
module attributes {stable_mosaic.version = 11 : i64} {
  func.func @lstm_seq_kernel(%arg0: memref<8x16xf32, #tpu.memory_space<vmem>>, %arg1: memref<2x32xf32, #tpu.memory_space<vmem>>, %arg2: memref<2x32xf32, #tpu.memory_space<vmem>>, %arg3: memref<16x128xf32, #tpu.memory_space<vmem>>, %arg4: memref<32x128xf32, #tpu.memory_space<vmem>>, %arg5: memref<1x128xf32, #tpu.memory_space<vmem>>, %arg6: memref<32x128xf32, #tpu.memory_space<vmem>>, %arg7: memref<32x128xf32, #tpu.memory_space<vmem>>, %arg8: memref<1x128xf32, #tpu.memory_space<vmem>>, %arg9: memref<32x16xf32, #tpu.memory_space<vmem>>, %arg10: memref<1x16xf32, #tpu.memory_space<vmem>>, %arg11: memref<8x16xf32, #tpu.memory_space<vmem>>, %arg12: memref<2x32xf32, #tpu.memory_space<vmem>>, %arg13: memref<2x32xf32, #tpu.memory_space<vmem>>) attributes {dimension_semantics = [], scalar_prefetch = 0 : i64, scratch_operands = 0 : i64, tpu.core_type = #tpu.core_type<tc>} {
    %c0 = arith.constant 0 : index
    %c0_0 = arith.constant 0 : index
    %0 = vector.load %arg0[%c0, %c0_0] : memref<8x16xf32, #tpu.memory_space<vmem>>, vector<8x16xf32>
    %c0_1 = arith.constant 0 : index
    %c0_2 = arith.constant 0 : index
    %1 = vector.load %arg3[%c0_1, %c0_2] : memref<16x128xf32, #tpu.memory_space<vmem>>, vector<16x128xf32>
    %cst = arith.constant dense<0.000000e+00> : vector<8x128xf32>
    %2 = tpu.matmul %0, %1, %cst {dimension_numbers = #tpu.dot_dimension_numbers<[1], [0], [0], [1], [0, 0, 1, 1], [], []>} : vector<8x16xf32>, vector<16x128xf32>, vector<8x128xf32> -> vector<8x128xf32>
    %c0_3 = arith.constant 0 : index
    %c0_4 = arith.constant 0 : index
    %3 = vector.load %arg5[%c0_3, %c0_4] : memref<1x128xf32, #tpu.memory_space<vmem>>, vector<1x128xf32>
    %4 = vector.broadcast %3 : vector<1x128xf32> to vector<8x128xf32>
    %5 = arith.addf %2, %4 : vector<8x128xf32>
    %c0_5 = arith.constant 0 : index
    %c0_6 = arith.constant 0 : index
    %6 = vector.load %arg4[%c0_5, %c0_6] : memref<32x128xf32, #tpu.memory_space<vmem>>, vector<32x128xf32>
    %c0_7 = arith.constant 0 : index
    %c0_8 = arith.constant 0 : index
    %7 = vector.load %arg6[%c0_7, %c0_8] : memref<32x128xf32, #tpu.memory_space<vmem>>, vector<32x128xf32>
    %c0_9 = arith.constant 0 : index
    %c0_10 = arith.constant 0 : index
    %8 = vector.load %arg7[%c0_9, %c0_10] : memref<32x128xf32, #tpu.memory_space<vmem>>, vector<32x128xf32>
    %c0_11 = arith.constant 0 : index
    %c0_12 = arith.constant 0 : index
    %9 = vector.load %arg8[%c0_11, %c0_12] : memref<1x128xf32, #tpu.memory_space<vmem>>, vector<1x128xf32>
    %c0_13 = arith.constant 0 : index
    %c0_14 = arith.constant 0 : index
    %10 = vector.load %arg9[%c0_13, %c0_14] : memref<32x16xf32, #tpu.memory_space<vmem>>, vector<32x16xf32>
    %c0_15 = arith.constant 0 : index
    %c0_16 = arith.constant 0 : index
    %11 = vector.load %arg10[%c0_15, %c0_16] : memref<1x16xf32, #tpu.memory_space<vmem>>, vector<1x16xf32>
    %c1 = arith.constant 1 : index
    %c0_17 = arith.constant 0 : index
    %12 = vector.load %arg1[%c1, %c0_17] : memref<2x32xf32, #tpu.memory_space<vmem>>, vector<1x32xf32>
    %c1_18 = arith.constant 1 : index
    %c0_19 = arith.constant 0 : index
    %13 = vector.load %arg2[%c1_18, %c0_19] : memref<2x32xf32, #tpu.memory_space<vmem>>, vector<1x32xf32>
    %c0_20 = arith.constant 0 : index
    %c0_21 = arith.constant 0 : index
    %14 = vector.load %arg1[%c0_20, %c0_21] : memref<2x32xf32, #tpu.memory_space<vmem>>, vector<1x32xf32>
    %c0_22 = arith.constant 0 : index
    %c0_23 = arith.constant 0 : index
    %15 = vector.load %arg2[%c0_22, %c0_23] : memref<2x32xf32, #tpu.memory_space<vmem>>, vector<1x32xf32>
    %16 = vector.extract_strided_slice %5 {offsets = [0, 0], sizes = [1, 128], strides = [1, 1]} : vector<8x128xf32> to vector<1x128xf32>
    %cst_24 = arith.constant dense<0.000000e+00> : vector<1x128xf32>
    %17 = tpu.matmul %12, %6, %cst_24 {dimension_numbers = #tpu.dot_dimension_numbers<[1], [0], [0], [1], [0, 0, 1, 1], [], []>} : vector<1x32xf32>, vector<32x128xf32>, vector<1x128xf32> -> vector<1x128xf32>
    %18 = arith.addf %16, %17 : vector<1x128xf32>
    %19 = arith.negf %18 : vector<1x128xf32>
    %20 = math.exp %19 : vector<1x128xf32>
    %cst_25 = arith.constant 1.000000e+00 : f32
    %21 = vector.broadcast %cst_25 : f32 to vector<1x128xf32>
    %22 = arith.addf %21, %20 : vector<1x128xf32>
    %23 = arith.divf %21, %22 : vector<1x128xf32>
    %24 = math.tanh %18 : vector<1x128xf32>
    %25 = vector.extract_strided_slice %23 {offsets = [0, 0], sizes = [1, 32], strides = [1, 1]} : vector<1x128xf32> to vector<1x32xf32>
    %26 = vector.extract_strided_slice %23 {offsets = [0, 32], sizes = [1, 32], strides = [1, 1]} : vector<1x128xf32> to vector<1x32xf32>
    %27 = vector.extract_strided_slice %24 {offsets = [0, 64], sizes = [1, 32], strides = [1, 1]} : vector<1x128xf32> to vector<1x32xf32>
    %28 = vector.extract_strided_slice %23 {offsets = [0, 96], sizes = [1, 32], strides = [1, 1]} : vector<1x128xf32> to vector<1x32xf32>
    %29 = arith.mulf %26, %13 : vector<1x32xf32>
    %30 = arith.mulf %25, %27 : vector<1x32xf32>
    %31 = arith.addf %29, %30 : vector<1x32xf32>
    %32 = math.tanh %31 : vector<1x32xf32>
    %33 = arith.mulf %28, %32 : vector<1x32xf32>
    %cst_26 = arith.constant dense<0.000000e+00> : vector<1x128xf32>
    %34 = tpu.matmul %31, %7, %cst_26 {dimension_numbers = #tpu.dot_dimension_numbers<[1], [0], [0], [1], [0, 0, 1, 1], [], []>} : vector<1x32xf32>, vector<32x128xf32>, vector<1x128xf32> -> vector<1x128xf32>
    %cst_27 = arith.constant dense<0.000000e+00> : vector<1x128xf32>
    %35 = tpu.matmul %14, %8, %cst_27 {dimension_numbers = #tpu.dot_dimension_numbers<[1], [0], [0], [1], [0, 0, 1, 1], [], []>} : vector<1x32xf32>, vector<32x128xf32>, vector<1x128xf32> -> vector<1x128xf32>
    %36 = arith.addf %34, %35 : vector<1x128xf32>
    %37 = arith.addf %36, %9 : vector<1x128xf32>
    %38 = arith.negf %37 : vector<1x128xf32>
    %39 = math.exp %38 : vector<1x128xf32>
    %cst_28 = arith.constant 1.000000e+00 : f32
    %40 = vector.broadcast %cst_28 : f32 to vector<1x128xf32>
    %41 = arith.addf %40, %39 : vector<1x128xf32>
    %42 = arith.divf %40, %41 : vector<1x128xf32>
    %43 = math.tanh %37 : vector<1x128xf32>
    %44 = vector.extract_strided_slice %42 {offsets = [0, 0], sizes = [1, 32], strides = [1, 1]} : vector<1x128xf32> to vector<1x32xf32>
    %45 = vector.extract_strided_slice %42 {offsets = [0, 32], sizes = [1, 32], strides = [1, 1]} : vector<1x128xf32> to vector<1x32xf32>
    %46 = vector.extract_strided_slice %43 {offsets = [0, 64], sizes = [1, 32], strides = [1, 1]} : vector<1x128xf32> to vector<1x32xf32>
    %47 = vector.extract_strided_slice %42 {offsets = [0, 96], sizes = [1, 32], strides = [1, 1]} : vector<1x128xf32> to vector<1x32xf32>
    %48 = arith.mulf %45, %15 : vector<1x32xf32>
    %49 = arith.mulf %44, %46 : vector<1x32xf32>
    %50 = arith.addf %48, %49 : vector<1x32xf32>
    %51 = math.tanh %50 : vector<1x32xf32>
    %52 = arith.mulf %47, %51 : vector<1x32xf32>
    %cst_29 = arith.constant dense<0.000000e+00> : vector<1x16xf32>
    %53 = tpu.matmul %50, %10, %cst_29 {dimension_numbers = #tpu.dot_dimension_numbers<[1], [0], [0], [1], [0, 0, 1, 1], [], []>} : vector<1x32xf32>, vector<32x16xf32>, vector<1x16xf32> -> vector<1x16xf32>
    %54 = arith.addf %53, %11 : vector<1x16xf32>
    %cst_30 = arith.constant dense<0xFF800000> : vector<1xf32>
    %55 = vector.multi_reduction <maximumf>, %54, %cst_30 [1] : vector<1x16xf32> to vector<1xf32>
    %56 = vector.shape_cast %55 : vector<1xf32> to vector<1x1xf32>
    %57 = vector.broadcast %56 : vector<1x1xf32> to vector<1x16xf32>
    %58 = arith.subf %54, %57 : vector<1x16xf32>
    %59 = math.exp %58 : vector<1x16xf32>
    %cst_31 = arith.constant dense<0.000000e+00> : vector<1xf32>
    %60 = vector.multi_reduction <add>, %59, %cst_31 [1] : vector<1x16xf32> to vector<1xf32>
    %61 = vector.shape_cast %60 : vector<1xf32> to vector<1x1xf32>
    %62 = math.log %61 : vector<1x1xf32>
    %63 = arith.addf %56, %62 : vector<1x1xf32>
    %64 = vector.broadcast %63 : vector<1x1xf32> to vector<1x16xf32>
    %65 = arith.subf %54, %64 : vector<1x16xf32>
    %c0_32 = arith.constant 0 : index
    %c0_33 = arith.constant 0 : index
    %66 = vector.load %arg11[%c0_32, %c0_33] : memref<8x16xf32, #tpu.memory_space<vmem>>, vector<1x16xf32>
    tpu.vector_store %arg11[%c0_32, %c0_33], %65 {strides = array<i32>} : memref<8x16xf32, #tpu.memory_space<vmem>>, vector<1x16xf32>,
    %67 = vector.extract_strided_slice %5 {offsets = [1, 0], sizes = [1, 128], strides = [1, 1]} : vector<8x128xf32> to vector<1x128xf32>
    %cst_34 = arith.constant dense<0.000000e+00> : vector<1x128xf32>
    %68 = tpu.matmul %52, %6, %cst_34 {dimension_numbers = #tpu.dot_dimension_numbers<[1], [0], [0], [1], [0, 0, 1, 1], [], []>} : vector<1x32xf32>, vector<32x128xf32>, vector<1x128xf32> -> vector<1x128xf32>
    %69 = arith.addf %67, %68 : vector<1x128xf32>
    %70 = arith.negf %69 : vector<1x128xf32>
    %71 = math.exp %70 : vector<1x128xf32>
    %cst_35 = arith.constant 1.000000e+00 : f32
    %72 = vector.broadcast %cst_35 : f32 to vector<1x128xf32>
    %73 = arith.addf %72, %71 : vector<1x128xf32>
    %74 = arith.divf %72, %73 : vector<1x128xf32>
    %75 = math.tanh %69 : vector<1x128xf32>
    %76 = vector.extract_strided_slice %74 {offsets = [0, 0], sizes = [1, 32], strides = [1, 1]} : vector<1x128xf32> to vector<1x32xf32>
    %77 = vector.extract_strided_slice %74 {offsets = [0, 32], sizes = [1, 32], strides = [1, 1]} : vector<1x128xf32> to vector<1x32xf32>
    %78 = vector.extract_strided_slice %75 {offsets = [0, 64], sizes = [1, 32], strides = [1, 1]} : vector<1x128xf32> to vector<1x32xf32>
    %79 = vector.extract_strided_slice %74 {offsets = [0, 96], sizes = [1, 32], strides = [1, 1]} : vector<1x128xf32> to vector<1x32xf32>
    %80 = arith.mulf %77, %50 : vector<1x32xf32>
    %81 = arith.mulf %76, %78 : vector<1x32xf32>
    %82 = arith.addf %80, %81 : vector<1x32xf32>
    %83 = math.tanh %82 : vector<1x32xf32>
    %84 = arith.mulf %79, %83 : vector<1x32xf32>
    %cst_36 = arith.constant dense<0.000000e+00> : vector<1x128xf32>
    %85 = tpu.matmul %82, %7, %cst_36 {dimension_numbers = #tpu.dot_dimension_numbers<[1], [0], [0], [1], [0, 0, 1, 1], [], []>} : vector<1x32xf32>, vector<32x128xf32>, vector<1x128xf32> -> vector<1x128xf32>
    %cst_37 = arith.constant dense<0.000000e+00> : vector<1x128xf32>
    %86 = tpu.matmul %33, %8, %cst_37 {dimension_numbers = #tpu.dot_dimension_numbers<[1], [0], [0], [1], [0, 0, 1, 1], [], []>} : vector<1x32xf32>, vector<32x128xf32>, vector<1x128xf32> -> vector<1x128xf32>
    %87 = arith.addf %85, %86 : vector<1x128xf32>
    %88 = arith.addf %87, %9 : vector<1x128xf32>
    %89 = arith.negf %88 : vector<1x128xf32>
    %90 = math.exp %89 : vector<1x128xf32>
    %cst_38 = arith.constant 1.000000e+00 : f32
    %91 = vector.broadcast %cst_38 : f32 to vector<1x128xf32>
    %92 = arith.addf %91, %90 : vector<1x128xf32>
    %93 = arith.divf %91, %92 : vector<1x128xf32>
    %94 = math.tanh %88 : vector<1x128xf32>
    %95 = vector.extract_strided_slice %93 {offsets = [0, 0], sizes = [1, 32], strides = [1, 1]} : vector<1x128xf32> to vector<1x32xf32>
    %96 = vector.extract_strided_slice %93 {offsets = [0, 32], sizes = [1, 32], strides = [1, 1]} : vector<1x128xf32> to vector<1x32xf32>
    %97 = vector.extract_strided_slice %94 {offsets = [0, 64], sizes = [1, 32], strides = [1, 1]} : vector<1x128xf32> to vector<1x32xf32>
    %98 = vector.extract_strided_slice %93 {offsets = [0, 96], sizes = [1, 32], strides = [1, 1]} : vector<1x128xf32> to vector<1x32xf32>
    %99 = arith.mulf %96, %31 : vector<1x32xf32>
    %100 = arith.mulf %95, %97 : vector<1x32xf32>
    %101 = arith.addf %99, %100 : vector<1x32xf32>
    %102 = math.tanh %101 : vector<1x32xf32>
    %103 = arith.mulf %98, %102 : vector<1x32xf32>
    %cst_39 = arith.constant dense<0.000000e+00> : vector<1x16xf32>
    %104 = tpu.matmul %101, %10, %cst_39 {dimension_numbers = #tpu.dot_dimension_numbers<[1], [0], [0], [1], [0, 0, 1, 1], [], []>} : vector<1x32xf32>, vector<32x16xf32>, vector<1x16xf32> -> vector<1x16xf32>
    %105 = arith.addf %104, %11 : vector<1x16xf32>
    %cst_40 = arith.constant dense<0xFF800000> : vector<1xf32>
    %106 = vector.multi_reduction <maximumf>, %105, %cst_40 [1] : vector<1x16xf32> to vector<1xf32>
    %107 = vector.shape_cast %106 : vector<1xf32> to vector<1x1xf32>
    %108 = vector.broadcast %107 : vector<1x1xf32> to vector<1x16xf32>
    %109 = arith.subf %105, %108 : vector<1x16xf32>
    %110 = math.exp %109 : vector<1x16xf32>
    %cst_41 = arith.constant dense<0.000000e+00> : vector<1xf32>
    %111 = vector.multi_reduction <add>, %110, %cst_41 [1] : vector<1x16xf32> to vector<1xf32>
    %112 = vector.shape_cast %111 : vector<1xf32> to vector<1x1xf32>
    %113 = math.log %112 : vector<1x1xf32>
    %114 = arith.addf %107, %113 : vector<1x1xf32>
    %115 = vector.broadcast %114 : vector<1x1xf32> to vector<1x16xf32>
    %116 = arith.subf %105, %115 : vector<1x16xf32>
    %c1_42 = arith.constant 1 : index
    %c0_43 = arith.constant 0 : index
    %117 = vector.load %arg11[%c1_42, %c0_43] : memref<8x16xf32, #tpu.memory_space<vmem>>, vector<1x16xf32>
    tpu.vector_store %arg11[%c1_42, %c0_43], %116 {strides = array<i32>} : memref<8x16xf32, #tpu.memory_space<vmem>>, vector<1x16xf32>,
    %118 = vector.extract_strided_slice %5 {offsets = [2, 0], sizes = [1, 128], strides = [1, 1]} : vector<8x128xf32> to vector<1x128xf32>
    %cst_44 = arith.constant dense<0.000000e+00> : vector<1x128xf32>
    %119 = tpu.matmul %103, %6, %cst_44 {dimension_numbers = #tpu.dot_dimension_numbers<[1], [0], [0], [1], [0, 0, 1, 1], [], []>} : vector<1x32xf32>, vector<32x128xf32>, vector<1x128xf32> -> vector<1x128xf32>
    %120 = arith.addf %118, %119 : vector<1x128xf32>
    %121 = arith.negf %120 : vector<1x128xf32>
    %122 = math.exp %121 : vector<1x128xf32>
    %cst_45 = arith.constant 1.000000e+00 : f32
    %123 = vector.broadcast %cst_45 : f32 to vector<1x128xf32>
    %124 = arith.addf %123, %122 : vector<1x128xf32>
    %125 = arith.divf %123, %124 : vector<1x128xf32>
    %126 = math.tanh %120 : vector<1x128xf32>
    %127 = vector.extract_strided_slice %125 {offsets = [0, 0], sizes = [1, 32], strides = [1, 1]} : vector<1x128xf32> to vector<1x32xf32>
    %128 = vector.extract_strided_slice %125 {offsets = [0, 32], sizes = [1, 32], strides = [1, 1]} : vector<1x128xf32> to vector<1x32xf32>
    %129 = vector.extract_strided_slice %126 {offsets = [0, 64], sizes = [1, 32], strides = [1, 1]} : vector<1x128xf32> to vector<1x32xf32>
    %130 = vector.extract_strided_slice %125 {offsets = [0, 96], sizes = [1, 32], strides = [1, 1]} : vector<1x128xf32> to vector<1x32xf32>
    %131 = arith.mulf %128, %101 : vector<1x32xf32>
    %132 = arith.mulf %127, %129 : vector<1x32xf32>
    %133 = arith.addf %131, %132 : vector<1x32xf32>
    %134 = math.tanh %133 : vector<1x32xf32>
    %135 = arith.mulf %130, %134 : vector<1x32xf32>
    %cst_46 = arith.constant dense<0.000000e+00> : vector<1x128xf32>
    %136 = tpu.matmul %133, %7, %cst_46 {dimension_numbers = #tpu.dot_dimension_numbers<[1], [0], [0], [1], [0, 0, 1, 1], [], []>} : vector<1x32xf32>, vector<32x128xf32>, vector<1x128xf32> -> vector<1x128xf32>
    %cst_47 = arith.constant dense<0.000000e+00> : vector<1x128xf32>
    %137 = tpu.matmul %84, %8, %cst_47 {dimension_numbers = #tpu.dot_dimension_numbers<[1], [0], [0], [1], [0, 0, 1, 1], [], []>} : vector<1x32xf32>, vector<32x128xf32>, vector<1x128xf32> -> vector<1x128xf32>
    %138 = arith.addf %136, %137 : vector<1x128xf32>
    %139 = arith.addf %138, %9 : vector<1x128xf32>
    %140 = arith.negf %139 : vector<1x128xf32>
    %141 = math.exp %140 : vector<1x128xf32>
    %cst_48 = arith.constant 1.000000e+00 : f32
    %142 = vector.broadcast %cst_48 : f32 to vector<1x128xf32>
    %143 = arith.addf %142, %141 : vector<1x128xf32>
    %144 = arith.divf %142, %143 : vector<1x128xf32>
    %145 = math.tanh %139 : vector<1x128xf32>
    %146 = vector.extract_strided_slice %144 {offsets = [0, 0], sizes = [1, 32], strides = [1, 1]} : vector<1x128xf32> to vector<1x32xf32>
    %147 = vector.extract_strided_slice %144 {offsets = [0, 32], sizes = [1, 32], strides = [1, 1]} : vector<1x128xf32> to vector<1x32xf32>
    %148 = vector.extract_strided_slice %145 {offsets = [0, 64], sizes = [1, 32], strides = [1, 1]} : vector<1x128xf32> to vector<1x32xf32>
    %149 = vector.extract_strided_slice %144 {offsets = [0, 96], sizes = [1, 32], strides = [1, 1]} : vector<1x128xf32> to vector<1x32xf32>
    %150 = arith.mulf %147, %82 : vector<1x32xf32>
    %151 = arith.mulf %146, %148 : vector<1x32xf32>
    %152 = arith.addf %150, %151 : vector<1x32xf32>
    %153 = math.tanh %152 : vector<1x32xf32>
    %154 = arith.mulf %149, %153 : vector<1x32xf32>
    %cst_49 = arith.constant dense<0.000000e+00> : vector<1x16xf32>
    %155 = tpu.matmul %152, %10, %cst_49 {dimension_numbers = #tpu.dot_dimension_numbers<[1], [0], [0], [1], [0, 0, 1, 1], [], []>} : vector<1x32xf32>, vector<32x16xf32>, vector<1x16xf32> -> vector<1x16xf32>
    %156 = arith.addf %155, %11 : vector<1x16xf32>
    %cst_50 = arith.constant dense<0xFF800000> : vector<1xf32>
    %157 = vector.multi_reduction <maximumf>, %156, %cst_50 [1] : vector<1x16xf32> to vector<1xf32>
    %158 = vector.shape_cast %157 : vector<1xf32> to vector<1x1xf32>
    %159 = vector.broadcast %158 : vector<1x1xf32> to vector<1x16xf32>
    %160 = arith.subf %156, %159 : vector<1x16xf32>
    %161 = math.exp %160 : vector<1x16xf32>
    %cst_51 = arith.constant dense<0.000000e+00> : vector<1xf32>
    %162 = vector.multi_reduction <add>, %161, %cst_51 [1] : vector<1x16xf32> to vector<1xf32>
    %163 = vector.shape_cast %162 : vector<1xf32> to vector<1x1xf32>
    %164 = math.log %163 : vector<1x1xf32>
    %165 = arith.addf %158, %164 : vector<1x1xf32>
    %166 = vector.broadcast %165 : vector<1x1xf32> to vector<1x16xf32>
    %167 = arith.subf %156, %166 : vector<1x16xf32>
    %c2 = arith.constant 2 : index
    %c0_52 = arith.constant 0 : index
    %168 = vector.load %arg11[%c2, %c0_52] : memref<8x16xf32, #tpu.memory_space<vmem>>, vector<1x16xf32>
    tpu.vector_store %arg11[%c2, %c0_52], %167 {strides = array<i32>} : memref<8x16xf32, #tpu.memory_space<vmem>>, vector<1x16xf32>,
    %169 = vector.extract_strided_slice %5 {offsets = [3, 0], sizes = [1, 128], strides = [1, 1]} : vector<8x128xf32> to vector<1x128xf32>
    %cst_53 = arith.constant dense<0.000000e+00> : vector<1x128xf32>
    %170 = tpu.matmul %154, %6, %cst_53 {dimension_numbers = #tpu.dot_dimension_numbers<[1], [0], [0], [1], [0, 0, 1, 1], [], []>} : vector<1x32xf32>, vector<32x128xf32>, vector<1x128xf32> -> vector<1x128xf32>
    %171 = arith.addf %169, %170 : vector<1x128xf32>
    %172 = arith.negf %171 : vector<1x128xf32>
    %173 = math.exp %172 : vector<1x128xf32>
    %cst_54 = arith.constant 1.000000e+00 : f32
    %174 = vector.broadcast %cst_54 : f32 to vector<1x128xf32>
    %175 = arith.addf %174, %173 : vector<1x128xf32>
    %176 = arith.divf %174, %175 : vector<1x128xf32>
    %177 = math.tanh %171 : vector<1x128xf32>
    %178 = vector.extract_strided_slice %176 {offsets = [0, 0], sizes = [1, 32], strides = [1, 1]} : vector<1x128xf32> to vector<1x32xf32>
    %179 = vector.extract_strided_slice %176 {offsets = [0, 32], sizes = [1, 32], strides = [1, 1]} : vector<1x128xf32> to vector<1x32xf32>
    %180 = vector.extract_strided_slice %177 {offsets = [0, 64], sizes = [1, 32], strides = [1, 1]} : vector<1x128xf32> to vector<1x32xf32>
    %181 = vector.extract_strided_slice %176 {offsets = [0, 96], sizes = [1, 32], strides = [1, 1]} : vector<1x128xf32> to vector<1x32xf32>
    %182 = arith.mulf %179, %152 : vector<1x32xf32>
    %183 = arith.mulf %178, %180 : vector<1x32xf32>
    %184 = arith.addf %182, %183 : vector<1x32xf32>
    %185 = math.tanh %184 : vector<1x32xf32>
    %186 = arith.mulf %181, %185 : vector<1x32xf32>
    %cst_55 = arith.constant dense<0.000000e+00> : vector<1x128xf32>
    %187 = tpu.matmul %184, %7, %cst_55 {dimension_numbers = #tpu.dot_dimension_numbers<[1], [0], [0], [1], [0, 0, 1, 1], [], []>} : vector<1x32xf32>, vector<32x128xf32>, vector<1x128xf32> -> vector<1x128xf32>
    %cst_56 = arith.constant dense<0.000000e+00> : vector<1x128xf32>
    %188 = tpu.matmul %135, %8, %cst_56 {dimension_numbers = #tpu.dot_dimension_numbers<[1], [0], [0], [1], [0, 0, 1, 1], [], []>} : vector<1x32xf32>, vector<32x128xf32>, vector<1x128xf32> -> vector<1x128xf32>
    %189 = arith.addf %187, %188 : vector<1x128xf32>
    %190 = arith.addf %189, %9 : vector<1x128xf32>
    %191 = arith.negf %190 : vector<1x128xf32>
    %192 = math.exp %191 : vector<1x128xf32>
    %cst_57 = arith.constant 1.000000e+00 : f32
    %193 = vector.broadcast %cst_57 : f32 to vector<1x128xf32>
    %194 = arith.addf %193, %192 : vector<1x128xf32>
    %195 = arith.divf %193, %194 : vector<1x128xf32>
    %196 = math.tanh %190 : vector<1x128xf32>
    %197 = vector.extract_strided_slice %195 {offsets = [0, 0], sizes = [1, 32], strides = [1, 1]} : vector<1x128xf32> to vector<1x32xf32>
    %198 = vector.extract_strided_slice %195 {offsets = [0, 32], sizes = [1, 32], strides = [1, 1]} : vector<1x128xf32> to vector<1x32xf32>
    %199 = vector.extract_strided_slice %196 {offsets = [0, 64], sizes = [1, 32], strides = [1, 1]} : vector<1x128xf32> to vector<1x32xf32>
    %200 = vector.extract_strided_slice %195 {offsets = [0, 96], sizes = [1, 32], strides = [1, 1]} : vector<1x128xf32> to vector<1x32xf32>
    %201 = arith.mulf %198, %133 : vector<1x32xf32>
    %202 = arith.mulf %197, %199 : vector<1x32xf32>
    %203 = arith.addf %201, %202 : vector<1x32xf32>
    %204 = math.tanh %203 : vector<1x32xf32>
    %205 = arith.mulf %200, %204 : vector<1x32xf32>
    %cst_58 = arith.constant dense<0.000000e+00> : vector<1x16xf32>
    %206 = tpu.matmul %203, %10, %cst_58 {dimension_numbers = #tpu.dot_dimension_numbers<[1], [0], [0], [1], [0, 0, 1, 1], [], []>} : vector<1x32xf32>, vector<32x16xf32>, vector<1x16xf32> -> vector<1x16xf32>
    %207 = arith.addf %206, %11 : vector<1x16xf32>
    %cst_59 = arith.constant dense<0xFF800000> : vector<1xf32>
    %208 = vector.multi_reduction <maximumf>, %207, %cst_59 [1] : vector<1x16xf32> to vector<1xf32>
    %209 = vector.shape_cast %208 : vector<1xf32> to vector<1x1xf32>
    %210 = vector.broadcast %209 : vector<1x1xf32> to vector<1x16xf32>
    %211 = arith.subf %207, %210 : vector<1x16xf32>
    %212 = math.exp %211 : vector<1x16xf32>
    %cst_60 = arith.constant dense<0.000000e+00> : vector<1xf32>
    %213 = vector.multi_reduction <add>, %212, %cst_60 [1] : vector<1x16xf32> to vector<1xf32>
    %214 = vector.shape_cast %213 : vector<1xf32> to vector<1x1xf32>
    %215 = math.log %214 : vector<1x1xf32>
    %216 = arith.addf %209, %215 : vector<1x1xf32>
    %217 = vector.broadcast %216 : vector<1x1xf32> to vector<1x16xf32>
    %218 = arith.subf %207, %217 : vector<1x16xf32>
    %c3 = arith.constant 3 : index
    %c0_61 = arith.constant 0 : index
    %219 = vector.load %arg11[%c3, %c0_61] : memref<8x16xf32, #tpu.memory_space<vmem>>, vector<1x16xf32>
    tpu.vector_store %arg11[%c3, %c0_61], %218 {strides = array<i32>} : memref<8x16xf32, #tpu.memory_space<vmem>>, vector<1x16xf32>,
    %220 = vector.extract_strided_slice %5 {offsets = [4, 0], sizes = [1, 128], strides = [1, 1]} : vector<8x128xf32> to vector<1x128xf32>
    %cst_62 = arith.constant dense<0.000000e+00> : vector<1x128xf32>
    %221 = tpu.matmul %205, %6, %cst_62 {dimension_numbers = #tpu.dot_dimension_numbers<[1], [0], [0], [1], [0, 0, 1, 1], [], []>} : vector<1x32xf32>, vector<32x128xf32>, vector<1x128xf32> -> vector<1x128xf32>
    %222 = arith.addf %220, %221 : vector<1x128xf32>
    %223 = arith.negf %222 : vector<1x128xf32>
    %224 = math.exp %223 : vector<1x128xf32>
    %cst_63 = arith.constant 1.000000e+00 : f32
    %225 = vector.broadcast %cst_63 : f32 to vector<1x128xf32>
    %226 = arith.addf %225, %224 : vector<1x128xf32>
    %227 = arith.divf %225, %226 : vector<1x128xf32>
    %228 = math.tanh %222 : vector<1x128xf32>
    %229 = vector.extract_strided_slice %227 {offsets = [0, 0], sizes = [1, 32], strides = [1, 1]} : vector<1x128xf32> to vector<1x32xf32>
    %230 = vector.extract_strided_slice %227 {offsets = [0, 32], sizes = [1, 32], strides = [1, 1]} : vector<1x128xf32> to vector<1x32xf32>
    %231 = vector.extract_strided_slice %228 {offsets = [0, 64], sizes = [1, 32], strides = [1, 1]} : vector<1x128xf32> to vector<1x32xf32>
    %232 = vector.extract_strided_slice %227 {offsets = [0, 96], sizes = [1, 32], strides = [1, 1]} : vector<1x128xf32> to vector<1x32xf32>
    %233 = arith.mulf %230, %203 : vector<1x32xf32>
    %234 = arith.mulf %229, %231 : vector<1x32xf32>
    %235 = arith.addf %233, %234 : vector<1x32xf32>
    %236 = math.tanh %235 : vector<1x32xf32>
    %237 = arith.mulf %232, %236 : vector<1x32xf32>
    %cst_64 = arith.constant dense<0.000000e+00> : vector<1x128xf32>
    %238 = tpu.matmul %235, %7, %cst_64 {dimension_numbers = #tpu.dot_dimension_numbers<[1], [0], [0], [1], [0, 0, 1, 1], [], []>} : vector<1x32xf32>, vector<32x128xf32>, vector<1x128xf32> -> vector<1x128xf32>
    %cst_65 = arith.constant dense<0.000000e+00> : vector<1x128xf32>
    %239 = tpu.matmul %186, %8, %cst_65 {dimension_numbers = #tpu.dot_dimension_numbers<[1], [0], [0], [1], [0, 0, 1, 1], [], []>} : vector<1x32xf32>, vector<32x128xf32>, vector<1x128xf32> -> vector<1x128xf32>
    %240 = arith.addf %238, %239 : vector<1x128xf32>
    %241 = arith.addf %240, %9 : vector<1x128xf32>
    %242 = arith.negf %241 : vector<1x128xf32>
    %243 = math.exp %242 : vector<1x128xf32>
    %cst_66 = arith.constant 1.000000e+00 : f32
    %244 = vector.broadcast %cst_66 : f32 to vector<1x128xf32>
    %245 = arith.addf %244, %243 : vector<1x128xf32>
    %246 = arith.divf %244, %245 : vector<1x128xf32>
    %247 = math.tanh %241 : vector<1x128xf32>
    %248 = vector.extract_strided_slice %246 {offsets = [0, 0], sizes = [1, 32], strides = [1, 1]} : vector<1x128xf32> to vector<1x32xf32>
    %249 = vector.extract_strided_slice %246 {offsets = [0, 32], sizes = [1, 32], strides = [1, 1]} : vector<1x128xf32> to vector<1x32xf32>
    %250 = vector.extract_strided_slice %247 {offsets = [0, 64], sizes = [1, 32], strides = [1, 1]} : vector<1x128xf32> to vector<1x32xf32>
    %251 = vector.extract_strided_slice %246 {offsets = [0, 96], sizes = [1, 32], strides = [1, 1]} : vector<1x128xf32> to vector<1x32xf32>
    %252 = arith.mulf %249, %184 : vector<1x32xf32>
    %253 = arith.mulf %248, %250 : vector<1x32xf32>
    %254 = arith.addf %252, %253 : vector<1x32xf32>
    %255 = math.tanh %254 : vector<1x32xf32>
    %256 = arith.mulf %251, %255 : vector<1x32xf32>
    %cst_67 = arith.constant dense<0.000000e+00> : vector<1x16xf32>
    %257 = tpu.matmul %254, %10, %cst_67 {dimension_numbers = #tpu.dot_dimension_numbers<[1], [0], [0], [1], [0, 0, 1, 1], [], []>} : vector<1x32xf32>, vector<32x16xf32>, vector<1x16xf32> -> vector<1x16xf32>
    %258 = arith.addf %257, %11 : vector<1x16xf32>
    %cst_68 = arith.constant dense<0xFF800000> : vector<1xf32>
    %259 = vector.multi_reduction <maximumf>, %258, %cst_68 [1] : vector<1x16xf32> to vector<1xf32>
    %260 = vector.shape_cast %259 : vector<1xf32> to vector<1x1xf32>
    %261 = vector.broadcast %260 : vector<1x1xf32> to vector<1x16xf32>
    %262 = arith.subf %258, %261 : vector<1x16xf32>
    %263 = math.exp %262 : vector<1x16xf32>
    %cst_69 = arith.constant dense<0.000000e+00> : vector<1xf32>
    %264 = vector.multi_reduction <add>, %263, %cst_69 [1] : vector<1x16xf32> to vector<1xf32>
    %265 = vector.shape_cast %264 : vector<1xf32> to vector<1x1xf32>
    %266 = math.log %265 : vector<1x1xf32>
    %267 = arith.addf %260, %266 : vector<1x1xf32>
    %268 = vector.broadcast %267 : vector<1x1xf32> to vector<1x16xf32>
    %269 = arith.subf %258, %268 : vector<1x16xf32>
    %c4 = arith.constant 4 : index
    %c0_70 = arith.constant 0 : index
    %270 = vector.load %arg11[%c4, %c0_70] : memref<8x16xf32, #tpu.memory_space<vmem>>, vector<1x16xf32>
    tpu.vector_store %arg11[%c4, %c0_70], %269 {strides = array<i32>} : memref<8x16xf32, #tpu.memory_space<vmem>>, vector<1x16xf32>,
    %271 = vector.extract_strided_slice %5 {offsets = [5, 0], sizes = [1, 128], strides = [1, 1]} : vector<8x128xf32> to vector<1x128xf32>
    %cst_71 = arith.constant dense<0.000000e+00> : vector<1x128xf32>
    %272 = tpu.matmul %256, %6, %cst_71 {dimension_numbers = #tpu.dot_dimension_numbers<[1], [0], [0], [1], [0, 0, 1, 1], [], []>} : vector<1x32xf32>, vector<32x128xf32>, vector<1x128xf32> -> vector<1x128xf32>
    %273 = arith.addf %271, %272 : vector<1x128xf32>
    %274 = arith.negf %273 : vector<1x128xf32>
    %275 = math.exp %274 : vector<1x128xf32>
    %cst_72 = arith.constant 1.000000e+00 : f32
    %276 = vector.broadcast %cst_72 : f32 to vector<1x128xf32>
    %277 = arith.addf %276, %275 : vector<1x128xf32>
    %278 = arith.divf %276, %277 : vector<1x128xf32>
    %279 = math.tanh %273 : vector<1x128xf32>
    %280 = vector.extract_strided_slice %278 {offsets = [0, 0], sizes = [1, 32], strides = [1, 1]} : vector<1x128xf32> to vector<1x32xf32>
    %281 = vector.extract_strided_slice %278 {offsets = [0, 32], sizes = [1, 32], strides = [1, 1]} : vector<1x128xf32> to vector<1x32xf32>
    %282 = vector.extract_strided_slice %279 {offsets = [0, 64], sizes = [1, 32], strides = [1, 1]} : vector<1x128xf32> to vector<1x32xf32>
    %283 = vector.extract_strided_slice %278 {offsets = [0, 96], sizes = [1, 32], strides = [1, 1]} : vector<1x128xf32> to vector<1x32xf32>
    %284 = arith.mulf %281, %254 : vector<1x32xf32>
    %285 = arith.mulf %280, %282 : vector<1x32xf32>
    %286 = arith.addf %284, %285 : vector<1x32xf32>
    %287 = math.tanh %286 : vector<1x32xf32>
    %288 = arith.mulf %283, %287 : vector<1x32xf32>
    %cst_73 = arith.constant dense<0.000000e+00> : vector<1x128xf32>
    %289 = tpu.matmul %286, %7, %cst_73 {dimension_numbers = #tpu.dot_dimension_numbers<[1], [0], [0], [1], [0, 0, 1, 1], [], []>} : vector<1x32xf32>, vector<32x128xf32>, vector<1x128xf32> -> vector<1x128xf32>
    %cst_74 = arith.constant dense<0.000000e+00> : vector<1x128xf32>
    %290 = tpu.matmul %237, %8, %cst_74 {dimension_numbers = #tpu.dot_dimension_numbers<[1], [0], [0], [1], [0, 0, 1, 1], [], []>} : vector<1x32xf32>, vector<32x128xf32>, vector<1x128xf32> -> vector<1x128xf32>
    %291 = arith.addf %289, %290 : vector<1x128xf32>
    %292 = arith.addf %291, %9 : vector<1x128xf32>
    %293 = arith.negf %292 : vector<1x128xf32>
    %294 = math.exp %293 : vector<1x128xf32>
    %cst_75 = arith.constant 1.000000e+00 : f32
    %295 = vector.broadcast %cst_75 : f32 to vector<1x128xf32>
    %296 = arith.addf %295, %294 : vector<1x128xf32>
    %297 = arith.divf %295, %296 : vector<1x128xf32>
    %298 = math.tanh %292 : vector<1x128xf32>
    %299 = vector.extract_strided_slice %297 {offsets = [0, 0], sizes = [1, 32], strides = [1, 1]} : vector<1x128xf32> to vector<1x32xf32>
    %300 = vector.extract_strided_slice %297 {offsets = [0, 32], sizes = [1, 32], strides = [1, 1]} : vector<1x128xf32> to vector<1x32xf32>
    %301 = vector.extract_strided_slice %298 {offsets = [0, 64], sizes = [1, 32], strides = [1, 1]} : vector<1x128xf32> to vector<1x32xf32>
    %302 = vector.extract_strided_slice %297 {offsets = [0, 96], sizes = [1, 32], strides = [1, 1]} : vector<1x128xf32> to vector<1x32xf32>
    %303 = arith.mulf %300, %235 : vector<1x32xf32>
    %304 = arith.mulf %299, %301 : vector<1x32xf32>
    %305 = arith.addf %303, %304 : vector<1x32xf32>
    %306 = math.tanh %305 : vector<1x32xf32>
    %307 = arith.mulf %302, %306 : vector<1x32xf32>
    %cst_76 = arith.constant dense<0.000000e+00> : vector<1x16xf32>
    %308 = tpu.matmul %305, %10, %cst_76 {dimension_numbers = #tpu.dot_dimension_numbers<[1], [0], [0], [1], [0, 0, 1, 1], [], []>} : vector<1x32xf32>, vector<32x16xf32>, vector<1x16xf32> -> vector<1x16xf32>
    %309 = arith.addf %308, %11 : vector<1x16xf32>
    %cst_77 = arith.constant dense<0xFF800000> : vector<1xf32>
    %310 = vector.multi_reduction <maximumf>, %309, %cst_77 [1] : vector<1x16xf32> to vector<1xf32>
    %311 = vector.shape_cast %310 : vector<1xf32> to vector<1x1xf32>
    %312 = vector.broadcast %311 : vector<1x1xf32> to vector<1x16xf32>
    %313 = arith.subf %309, %312 : vector<1x16xf32>
    %314 = math.exp %313 : vector<1x16xf32>
    %cst_78 = arith.constant dense<0.000000e+00> : vector<1xf32>
    %315 = vector.multi_reduction <add>, %314, %cst_78 [1] : vector<1x16xf32> to vector<1xf32>
    %316 = vector.shape_cast %315 : vector<1xf32> to vector<1x1xf32>
    %317 = math.log %316 : vector<1x1xf32>
    %318 = arith.addf %311, %317 : vector<1x1xf32>
    %319 = vector.broadcast %318 : vector<1x1xf32> to vector<1x16xf32>
    %320 = arith.subf %309, %319 : vector<1x16xf32>
    %c5 = arith.constant 5 : index
    %c0_79 = arith.constant 0 : index
    %321 = vector.load %arg11[%c5, %c0_79] : memref<8x16xf32, #tpu.memory_space<vmem>>, vector<1x16xf32>
    tpu.vector_store %arg11[%c5, %c0_79], %320 {strides = array<i32>} : memref<8x16xf32, #tpu.memory_space<vmem>>, vector<1x16xf32>,
    %322 = vector.extract_strided_slice %5 {offsets = [6, 0], sizes = [1, 128], strides = [1, 1]} : vector<8x128xf32> to vector<1x128xf32>
    %cst_80 = arith.constant dense<0.000000e+00> : vector<1x128xf32>
    %323 = tpu.matmul %307, %6, %cst_80 {dimension_numbers = #tpu.dot_dimension_numbers<[1], [0], [0], [1], [0, 0, 1, 1], [], []>} : vector<1x32xf32>, vector<32x128xf32>, vector<1x128xf32> -> vector<1x128xf32>
    %324 = arith.addf %322, %323 : vector<1x128xf32>
    %325 = arith.negf %324 : vector<1x128xf32>
    %326 = math.exp %325 : vector<1x128xf32>
    %cst_81 = arith.constant 1.000000e+00 : f32
    %327 = vector.broadcast %cst_81 : f32 to vector<1x128xf32>
    %328 = arith.addf %327, %326 : vector<1x128xf32>
    %329 = arith.divf %327, %328 : vector<1x128xf32>
    %330 = math.tanh %324 : vector<1x128xf32>
    %331 = vector.extract_strided_slice %329 {offsets = [0, 0], sizes = [1, 32], strides = [1, 1]} : vector<1x128xf32> to vector<1x32xf32>
    %332 = vector.extract_strided_slice %329 {offsets = [0, 32], sizes = [1, 32], strides = [1, 1]} : vector<1x128xf32> to vector<1x32xf32>
    %333 = vector.extract_strided_slice %330 {offsets = [0, 64], sizes = [1, 32], strides = [1, 1]} : vector<1x128xf32> to vector<1x32xf32>
    %334 = vector.extract_strided_slice %329 {offsets = [0, 96], sizes = [1, 32], strides = [1, 1]} : vector<1x128xf32> to vector<1x32xf32>
    %335 = arith.mulf %332, %305 : vector<1x32xf32>
    %336 = arith.mulf %331, %333 : vector<1x32xf32>
    %337 = arith.addf %335, %336 : vector<1x32xf32>
    %338 = math.tanh %337 : vector<1x32xf32>
    %339 = arith.mulf %334, %338 : vector<1x32xf32>
    %cst_82 = arith.constant dense<0.000000e+00> : vector<1x128xf32>
    %340 = tpu.matmul %337, %7, %cst_82 {dimension_numbers = #tpu.dot_dimension_numbers<[1], [0], [0], [1], [0, 0, 1, 1], [], []>} : vector<1x32xf32>, vector<32x128xf32>, vector<1x128xf32> -> vector<1x128xf32>
    %cst_83 = arith.constant dense<0.000000e+00> : vector<1x128xf32>
    %341 = tpu.matmul %288, %8, %cst_83 {dimension_numbers = #tpu.dot_dimension_numbers<[1], [0], [0], [1], [0, 0, 1, 1], [], []>} : vector<1x32xf32>, vector<32x128xf32>, vector<1x128xf32> -> vector<1x128xf32>
    %342 = arith.addf %340, %341 : vector<1x128xf32>
    %343 = arith.addf %342, %9 : vector<1x128xf32>
    %344 = arith.negf %343 : vector<1x128xf32>
    %345 = math.exp %344 : vector<1x128xf32>
    %cst_84 = arith.constant 1.000000e+00 : f32
    %346 = vector.broadcast %cst_84 : f32 to vector<1x128xf32>
    %347 = arith.addf %346, %345 : vector<1x128xf32>
    %348 = arith.divf %346, %347 : vector<1x128xf32>
    %349 = math.tanh %343 : vector<1x128xf32>
    %350 = vector.extract_strided_slice %348 {offsets = [0, 0], sizes = [1, 32], strides = [1, 1]} : vector<1x128xf32> to vector<1x32xf32>
    %351 = vector.extract_strided_slice %348 {offsets = [0, 32], sizes = [1, 32], strides = [1, 1]} : vector<1x128xf32> to vector<1x32xf32>
    %352 = vector.extract_strided_slice %349 {offsets = [0, 64], sizes = [1, 32], strides = [1, 1]} : vector<1x128xf32> to vector<1x32xf32>
    %353 = vector.extract_strided_slice %348 {offsets = [0, 96], sizes = [1, 32], strides = [1, 1]} : vector<1x128xf32> to vector<1x32xf32>
    %354 = arith.mulf %351, %286 : vector<1x32xf32>
    %355 = arith.mulf %350, %352 : vector<1x32xf32>
    %356 = arith.addf %354, %355 : vector<1x32xf32>
    %357 = math.tanh %356 : vector<1x32xf32>
    %358 = arith.mulf %353, %357 : vector<1x32xf32>
    %cst_85 = arith.constant dense<0.000000e+00> : vector<1x16xf32>
    %359 = tpu.matmul %356, %10, %cst_85 {dimension_numbers = #tpu.dot_dimension_numbers<[1], [0], [0], [1], [0, 0, 1, 1], [], []>} : vector<1x32xf32>, vector<32x16xf32>, vector<1x16xf32> -> vector<1x16xf32>
    %360 = arith.addf %359, %11 : vector<1x16xf32>
    %cst_86 = arith.constant dense<0xFF800000> : vector<1xf32>
    %361 = vector.multi_reduction <maximumf>, %360, %cst_86 [1] : vector<1x16xf32> to vector<1xf32>
    %362 = vector.shape_cast %361 : vector<1xf32> to vector<1x1xf32>
    %363 = vector.broadcast %362 : vector<1x1xf32> to vector<1x16xf32>
    %364 = arith.subf %360, %363 : vector<1x16xf32>
    %365 = math.exp %364 : vector<1x16xf32>
    %cst_87 = arith.constant dense<0.000000e+00> : vector<1xf32>
    %366 = vector.multi_reduction <add>, %365, %cst_87 [1] : vector<1x16xf32> to vector<1xf32>
    %367 = vector.shape_cast %366 : vector<1xf32> to vector<1x1xf32>
    %368 = math.log %367 : vector<1x1xf32>
    %369 = arith.addf %362, %368 : vector<1x1xf32>
    %370 = vector.broadcast %369 : vector<1x1xf32> to vector<1x16xf32>
    %371 = arith.subf %360, %370 : vector<1x16xf32>
    %c6 = arith.constant 6 : index
    %c0_88 = arith.constant 0 : index
    %372 = vector.load %arg11[%c6, %c0_88] : memref<8x16xf32, #tpu.memory_space<vmem>>, vector<1x16xf32>
    tpu.vector_store %arg11[%c6, %c0_88], %371 {strides = array<i32>} : memref<8x16xf32, #tpu.memory_space<vmem>>, vector<1x16xf32>,
    %373 = vector.extract_strided_slice %5 {offsets = [7, 0], sizes = [1, 128], strides = [1, 1]} : vector<8x128xf32> to vector<1x128xf32>
    %cst_89 = arith.constant dense<0.000000e+00> : vector<1x128xf32>
    %374 = tpu.matmul %358, %6, %cst_89 {dimension_numbers = #tpu.dot_dimension_numbers<[1], [0], [0], [1], [0, 0, 1, 1], [], []>} : vector<1x32xf32>, vector<32x128xf32>, vector<1x128xf32> -> vector<1x128xf32>
    %375 = arith.addf %373, %374 : vector<1x128xf32>
    %376 = arith.negf %375 : vector<1x128xf32>
    %377 = math.exp %376 : vector<1x128xf32>
    %cst_90 = arith.constant 1.000000e+00 : f32
    %378 = vector.broadcast %cst_90 : f32 to vector<1x128xf32>
    %379 = arith.addf %378, %377 : vector<1x128xf32>
    %380 = arith.divf %378, %379 : vector<1x128xf32>
    %381 = math.tanh %375 : vector<1x128xf32>
    %382 = vector.extract_strided_slice %380 {offsets = [0, 0], sizes = [1, 32], strides = [1, 1]} : vector<1x128xf32> to vector<1x32xf32>
    %383 = vector.extract_strided_slice %380 {offsets = [0, 32], sizes = [1, 32], strides = [1, 1]} : vector<1x128xf32> to vector<1x32xf32>
    %384 = vector.extract_strided_slice %381 {offsets = [0, 64], sizes = [1, 32], strides = [1, 1]} : vector<1x128xf32> to vector<1x32xf32>
    %385 = vector.extract_strided_slice %380 {offsets = [0, 96], sizes = [1, 32], strides = [1, 1]} : vector<1x128xf32> to vector<1x32xf32>
    %386 = arith.mulf %383, %356 : vector<1x32xf32>
    %387 = arith.mulf %382, %384 : vector<1x32xf32>
    %388 = arith.addf %386, %387 : vector<1x32xf32>
    %389 = math.tanh %388 : vector<1x32xf32>
    %390 = arith.mulf %385, %389 : vector<1x32xf32>
    %cst_91 = arith.constant dense<0.000000e+00> : vector<1x128xf32>
    %391 = tpu.matmul %388, %7, %cst_91 {dimension_numbers = #tpu.dot_dimension_numbers<[1], [0], [0], [1], [0, 0, 1, 1], [], []>} : vector<1x32xf32>, vector<32x128xf32>, vector<1x128xf32> -> vector<1x128xf32>
    %cst_92 = arith.constant dense<0.000000e+00> : vector<1x128xf32>
    %392 = tpu.matmul %339, %8, %cst_92 {dimension_numbers = #tpu.dot_dimension_numbers<[1], [0], [0], [1], [0, 0, 1, 1], [], []>} : vector<1x32xf32>, vector<32x128xf32>, vector<1x128xf32> -> vector<1x128xf32>
    %393 = arith.addf %391, %392 : vector<1x128xf32>
    %394 = arith.addf %393, %9 : vector<1x128xf32>
    %395 = arith.negf %394 : vector<1x128xf32>
    %396 = math.exp %395 : vector<1x128xf32>
    %cst_93 = arith.constant 1.000000e+00 : f32
    %397 = vector.broadcast %cst_93 : f32 to vector<1x128xf32>
    %398 = arith.addf %397, %396 : vector<1x128xf32>
    %399 = arith.divf %397, %398 : vector<1x128xf32>
    %400 = math.tanh %394 : vector<1x128xf32>
    %401 = vector.extract_strided_slice %399 {offsets = [0, 0], sizes = [1, 32], strides = [1, 1]} : vector<1x128xf32> to vector<1x32xf32>
    %402 = vector.extract_strided_slice %399 {offsets = [0, 32], sizes = [1, 32], strides = [1, 1]} : vector<1x128xf32> to vector<1x32xf32>
    %403 = vector.extract_strided_slice %400 {offsets = [0, 64], sizes = [1, 32], strides = [1, 1]} : vector<1x128xf32> to vector<1x32xf32>
    %404 = vector.extract_strided_slice %399 {offsets = [0, 96], sizes = [1, 32], strides = [1, 1]} : vector<1x128xf32> to vector<1x32xf32>
    %405 = arith.mulf %402, %337 : vector<1x32xf32>
    %406 = arith.mulf %401, %403 : vector<1x32xf32>
    %407 = arith.addf %405, %406 : vector<1x32xf32>
    %408 = math.tanh %407 : vector<1x32xf32>
    %409 = arith.mulf %404, %408 : vector<1x32xf32>
    %cst_94 = arith.constant dense<0.000000e+00> : vector<1x16xf32>
    %410 = tpu.matmul %407, %10, %cst_94 {dimension_numbers = #tpu.dot_dimension_numbers<[1], [0], [0], [1], [0, 0, 1, 1], [], []>} : vector<1x32xf32>, vector<32x16xf32>, vector<1x16xf32> -> vector<1x16xf32>
    %411 = arith.addf %410, %11 : vector<1x16xf32>
    %cst_95 = arith.constant dense<0xFF800000> : vector<1xf32>
    %412 = vector.multi_reduction <maximumf>, %411, %cst_95 [1] : vector<1x16xf32> to vector<1xf32>
    %413 = vector.shape_cast %412 : vector<1xf32> to vector<1x1xf32>
    %414 = vector.broadcast %413 : vector<1x1xf32> to vector<1x16xf32>
    %415 = arith.subf %411, %414 : vector<1x16xf32>
    %416 = math.exp %415 : vector<1x16xf32>
    %cst_96 = arith.constant dense<0.000000e+00> : vector<1xf32>
    %417 = vector.multi_reduction <add>, %416, %cst_96 [1] : vector<1x16xf32> to vector<1xf32>
    %418 = vector.shape_cast %417 : vector<1xf32> to vector<1x1xf32>
    %419 = math.log %418 : vector<1x1xf32>
    %420 = arith.addf %413, %419 : vector<1x1xf32>
    %421 = vector.broadcast %420 : vector<1x1xf32> to vector<1x16xf32>
    %422 = arith.subf %411, %421 : vector<1x16xf32>
    %c7 = arith.constant 7 : index
    %c0_97 = arith.constant 0 : index
    %423 = vector.load %arg11[%c7, %c0_97] : memref<8x16xf32, #tpu.memory_space<vmem>>, vector<1x16xf32>
    tpu.vector_store %arg11[%c7, %c0_97], %422 {strides = array<i32>} : memref<8x16xf32, #tpu.memory_space<vmem>>, vector<1x16xf32>,
    %c0_98 = arith.constant 0 : index
    %c0_99 = arith.constant 0 : index
    %424 = vector.load %arg12[%c0_98, %c0_99] : memref<2x32xf32, #tpu.memory_space<vmem>>, vector<1x32xf32>
    tpu.vector_store %arg12[%c0_98, %c0_99], %390 {strides = array<i32>} : memref<2x32xf32, #tpu.memory_space<vmem>>, vector<1x32xf32>,
    %c1_100 = arith.constant 1 : index
    %c0_101 = arith.constant 0 : index
    %425 = vector.load %arg12[%c1_100, %c0_101] : memref<2x32xf32, #tpu.memory_space<vmem>>, vector<1x32xf32>
    tpu.vector_store %arg12[%c1_100, %c0_101], %409 {strides = array<i32>} : memref<2x32xf32, #tpu.memory_space<vmem>>, vector<1x32xf32>,
    %c0_102 = arith.constant 0 : index
    %c0_103 = arith.constant 0 : index
    %426 = vector.load %arg13[%c0_102, %c0_103] : memref<2x32xf32, #tpu.memory_space<vmem>>, vector<1x32xf32>
    tpu.vector_store %arg13[%c0_102, %c0_103], %388 {strides = array<i32>} : memref<2x32xf32, #tpu.memory_space<vmem>>, vector<1x32xf32>,
    %c1_104 = arith.constant 1 : index
    %c0_105 = arith.constant 0 : index
    %427 = vector.load %arg13[%c1_104, %c0_105] : memref<2x32xf32, #tpu.memory_space<vmem>>, vector<1x32xf32>
    tpu.vector_store %arg13[%c1_104, %c0_105], %407 {strides = array<i32>} : memref<2x32xf32, #tpu.memory_space<vmem>>, vector<1x32xf32>,
    return
  }
}

</mosaic_0001>

<llo_original>
// kernel: lstm_forward_seq.1
$region0: #{lstm_forward_seq.1}
  #allocation0 [shape = 'u32[]', space=smem, size = 0x4, offset = 0x4, fixed_abs, tag = 'smem constant byte address 0x4 - core index']
  #allocation1 [shape = 'u32[72,128]{1,0:T(1,128)}', space=vmem, size = 0x9000, scoped, tag = 'internal scratch']
  %s0 = inlined_call_operand.hbm [shape: f32[8,16], index: 0, kind: input, shape index: {}]
  %s1 = inlined_call_operand.hbm [shape: f32[2,32], index: 1, kind: input, shape index: {}]
  %s2 = inlined_call_operand.hbm [shape: f32[2,32], index: 2, kind: input, shape index: {}]
  %s3 = inlined_call_operand.hbm [shape: f32[16,128], index: 3, kind: input, shape index: {}]
  %s4 = inlined_call_operand.hbm [shape: f32[32,128], index: 4, kind: input, shape index: {}]
  %s5 = inlined_call_operand.vmem [shape: f32[1,128], index: 5, kind: input, shape index: {}]
  %s6 = inlined_call_operand.hbm [shape: f32[32,128], index: 6, kind: input, shape index: {}]
  %s7 = inlined_call_operand.hbm [shape: f32[32,128], index: 7, kind: input, shape index: {}]
  %s8 = inlined_call_operand.vmem [shape: f32[1,128], index: 8, kind: input, shape index: {}]
  %s9 = inlined_call_operand.hbm [shape: f32[32,16], index: 9, kind: input, shape index: {}]
  %s10 = inlined_call_operand.hbm [shape: f32[1,16], index: 10, kind: input, shape index: {}]
  %s11 = inlined_call_operand.hbm [shape: f32[8,16], index: 11, kind: output, shape index: {0}]
  %s12 = inlined_call_operand.hbm [shape: f32[2,32], index: 12, kind: output, shape index: {1}]
  %s13 = inlined_call_operand.hbm [shape: f32[2,32], index: 13, kind: output, shape index: {2}]
  %14 = xla_tuple %s11, %s12, %s13
  %s15 = sld [smem:[#allocation0]]
  $region106: #{lstm_forward_seq.1} parent=0
    _
  %s17 = ssub.s32 1, %s15
  %s18 = scalar_select 0, %s17, %s15
  $region1: #{lstm_forward_seq.1} parent=0
    #allocation2 [shape = 'u8[4096]{0}', space=vmem, size = 0x1000, scoped, tag = 'input window, operand 0, single buffered']
    #allocation3 [shape = 's32[1]{0}', space=sflag, size = 0x4, scoped, tag = 'scoped memory for lstm_forward_seq.1']
    #allocation4 [shape = 's32[1]{0}', space=sflag, size = 0x4, scoped, tag = 'scoped memory for lstm_forward_seq.1']
    #allocation5 [shape = 'u8[1024]{0}', space=vmem, size = 0x400, scoped, tag = 'input window, operand 1, single buffered']
    #allocation6 [shape = 's32[1]{0}', space=sflag, size = 0x4, scoped, tag = 'scoped memory for lstm_forward_seq.1']
    #allocation7 [shape = 'u8[1024]{0}', space=vmem, size = 0x400, scoped, tag = 'input window, operand 2, single buffered']
    #allocation8 [shape = 'u8[8192]{0}', space=vmem, size = 0x2000, scoped, tag = 'input window, operand 3, single buffered']
    #allocation9 [shape = 's32[1]{0}', space=sflag, size = 0x4, scoped, tag = 'scoped memory for lstm_forward_seq.1']
    #allocation10 [shape = 'u8[16384]{0}', space=vmem, size = 0x4000, scoped, tag = 'input window, operand 4, single buffered']
    #allocation11 [shape = 'u8[16384]{0}', space=vmem, size = 0x4000, scoped, tag = 'input window, operand 6, single buffered']
    #allocation12 [shape = 's32[1]{0}', space=sflag, size = 0x4, scoped, tag = 'scoped memory for lstm_forward_seq.1']
    #allocation13 [shape = 'u8[16384]{0}', space=vmem, size = 0x4000, scoped, tag = 'input window, operand 7, single buffered']
    #allocation14 [shape = 'u8[16384]{0}', space=vmem, size = 0x4000, scoped, tag = 'input window, operand 9, single buffered']
    #allocation15 [shape = 's32[1]{0}', space=sflag, size = 0x4, scoped, tag = 'scoped memory for lstm_forward_seq.1']
    #allocation16 [shape = 'u8[512]{0}', space=vmem, size = 0x400, scoped, tag = 'input window, operand 10, single buffered']
    #allocation17 [shape = 'u8[4096]{0}', space=vmem, size = 0x1000, scoped, tag = 'output window, operand 0, single buffered']
    #allocation18 [shape = 'u8[1024]{0}', space=vmem, size = 0x400, scoped, tag = 'output window, operand 1, single buffered']
    #allocation19 [shape = 's32[1]{0}', space=sflag, size = 0x4, scoped, tag = 'scoped memory for lstm_forward_seq.1']
    #allocation20 [shape = 'u8[1024]{0}', space=vmem, size = 0x400, scoped, tag = 'output window, operand 2, single buffered']
    %19 = vsyncpa [#allocation3], 0
    %20 = vsyncpa [#allocation6], 0
    %21 = vsyncpa [#allocation9], 0
    %22 = vsyncpa [#allocation12], 0
    %23 = vsyncpa [#allocation15], 0
    %24 = vsyncpa [#allocation4], 0
    %25 = vsyncpa [#allocation19], 0
    // Predicated region
    $region2: #{lstm_forward_seq.1} parent=1 // pred_check
      _
    $region3: #{lstm_forward_seq.1} parent=1 // pred_check_branch
      %27 = sbr.rel (0) target = $region5
    $region4: #{lstm_forward_seq.1} parent=1 // pred_region
      %29 = vsyncadd [#allocation3], 0
      %s31 = sshll.u32 %s0, 4
      %s32 = int_to_ptr.hbm [resolvable:$true] %s31
      %s33 = sshll.u32 [#allocation2], 4
      %s34 = int_to_ptr.vmem [resolvable:$true] %s33
      %36 = dma.hbm_to_vmem [thread:$0]  %s32, 128, %s34, [#allocation3]
    $region5: #{lstm_forward_seq.1} parent=1 // pred_fallthru
      _
    // Predicated region
    $region6: #{lstm_forward_seq.1} parent=1 // pred_check
      _
    $region7: #{lstm_forward_seq.1} parent=1 // pred_check_branch
      %38 = sbr.rel (0) target = $region9
    $region8: #{lstm_forward_seq.1} parent=1 // pred_region
      %40 = vsyncadd [#allocation6], 0
      %s42 = sshll.u32 %s1, 4
      %s43 = int_to_ptr.hbm [resolvable:$true] %s42
      %s44 = sshll.u32 [#allocation5], 4
      %s45 = int_to_ptr.vmem [resolvable:$true] %s44
      %47 = dma.hbm_to_vmem [thread:$0]  %s43, 32, %s45, [#allocation6]
    $region9: #{lstm_forward_seq.1} parent=1 // pred_fallthru
      _
    // Predicated region
    $region10: #{lstm_forward_seq.1} parent=1 // pred_check
      _
    $region11: #{lstm_forward_seq.1} parent=1 // pred_check_branch
      %49 = sbr.rel (0) target = $region13
    $region12: #{lstm_forward_seq.1} parent=1 // pred_region
      %51 = vsyncadd [#allocation6], 0
      %s53 = sshll.u32 %s2, 4
      %s54 = int_to_ptr.hbm [resolvable:$true] %s53
      %s55 = sshll.u32 [#allocation7], 4
      %s56 = int_to_ptr.vmem [resolvable:$true] %s55
      %58 = dma.hbm_to_vmem [thread:$0]  %s54, 32, %s56, [#allocation6]
    $region13: #{lstm_forward_seq.1} parent=1 // pred_fallthru
      _
    // Predicated region
    $region14: #{lstm_forward_seq.1} parent=1 // pred_check
      _
    $region15: #{lstm_forward_seq.1} parent=1 // pred_check_branch
      %60 = sbr.rel (0) target = $region17
    $region16: #{lstm_forward_seq.1} parent=1 // pred_region
      %62 = vsyncadd [#allocation9], 0
      %s63 = sshll.u32 %s3, 4
      %s64 = int_to_ptr.hbm [resolvable:$true] %s63
      %s65 = sshll.u32 [#allocation8], 4
      %s66 = int_to_ptr.vmem [resolvable:$true] %s65
      %71 = dma.hbm_to_vmem [thread:$0]  %s64, 256, %s66, [#allocation9], 128, 128, 8
    $region17: #{lstm_forward_seq.1} parent=1 // pred_fallthru
      _
    // Predicated region
    $region18: #{lstm_forward_seq.1} parent=1 // pred_check
      _
    $region19: #{lstm_forward_seq.1} parent=1 // pred_check_branch
      %73 = sbr.rel (0) target = $region21
    $region20: #{lstm_forward_seq.1} parent=1 // pred_region
      %75 = vsyncadd [#allocation9], 0
      %s76 = sshll.u32 %s4, 4
      %s77 = int_to_ptr.hbm [resolvable:$true] %s76
      %s78 = sshll.u32 [#allocation10], 4
      %s79 = int_to_ptr.vmem [resolvable:$true] %s78
      %84 = dma.hbm_to_vmem [thread:$0]  %s77, 512, %s79, [#allocation9], 128, 128, 8
    $region21: #{lstm_forward_seq.1} parent=1 // pred_fallthru
      _
    // Predicated region
    $region22: #{lstm_forward_seq.1} parent=1 // pred_check
      _
    $region23: #{lstm_forward_seq.1} parent=1 // pred_check_branch
      %86 = sbr.rel (0) target = $region25
    $region24: #{lstm_forward_seq.1} parent=1 // pred_region
      _
    $region25: #{lstm_forward_seq.1} parent=1 // pred_fallthru
      _
    // Predicated region
    $region26: #{lstm_forward_seq.1} parent=1 // pred_check
      _
    $region27: #{lstm_forward_seq.1} parent=1 // pred_check_branch
      %88 = sbr.rel (0) target = $region29
    $region28: #{lstm_forward_seq.1} parent=1 // pred_region
      %90 = vsyncadd [#allocation12], 0
      %s91 = sshll.u32 %s6, 4
      %s92 = int_to_ptr.hbm [resolvable:$true] %s91
      %s93 = sshll.u32 [#allocation11], 4
      %s94 = int_to_ptr.vmem [resolvable:$true] %s93
      %99 = dma.hbm_to_vmem [thread:$0]  %s92, 512, %s94, [#allocation12], 128, 128, 8
    $region29: #{lstm_forward_seq.1} parent=1 // pred_fallthru
      _
    // Predicated region
    $region30: #{lstm_forward_seq.1} parent=1 // pred_check
      _
    $region31: #{lstm_forward_seq.1} parent=1 // pred_check_branch
      %101 = sbr.rel (0) target = $region33
    $region32: #{lstm_forward_seq.1} parent=1 // pred_region
      %103 = vsyncadd [#allocation12], 0
      %s104 = sshll.u32 %s7, 4
      %s105 = int_to_ptr.hbm [resolvable:$true] %s104
      %s106 = sshll.u32 [#allocation13], 4
      %s107 = int_to_ptr.vmem [resolvable:$true] %s106
      %112 = dma.hbm_to_vmem [thread:$0]  %s105, 512, %s107, [#allocation12], 128, 128, 8
    $region33: #{lstm_forward_seq.1} parent=1 // pred_fallthru
      _
    // Predicated region
    $region34: #{lstm_forward_seq.1} parent=1 // pred_check
      _
    $region35: #{lstm_forward_seq.1} parent=1 // pred_check_branch
      %114 = sbr.rel (0) target = $region37
    $region36: #{lstm_forward_seq.1} parent=1 // pred_region
      _
    $region37: #{lstm_forward_seq.1} parent=1 // pred_fallthru
      _
    // Predicated region
    $region38: #{lstm_forward_seq.1} parent=1 // pred_check
      _
    $region39: #{lstm_forward_seq.1} parent=1 // pred_check_branch
      %116 = sbr.rel (0) target = $region41
    $region40: #{lstm_forward_seq.1} parent=1 // pred_region
      %118 = vsyncadd [#allocation15], 0
      %s119 = sshll.u32 %s9, 4
      %s120 = int_to_ptr.hbm [resolvable:$true] %s119
      %s121 = sshll.u32 [#allocation14], 4
      %s122 = int_to_ptr.vmem [resolvable:$true] %s121
      %127 = dma.hbm_to_vmem [thread:$0]  %s120, 512, %s122, [#allocation15], 128, 128, 8
    $region41: #{lstm_forward_seq.1} parent=1 // pred_fallthru
      _
    // Predicated region
    $region42: #{lstm_forward_seq.1} parent=1 // pred_check
      _
    $region43: #{lstm_forward_seq.1} parent=1 // pred_check_branch
      %129 = sbr.rel (0) target = $region45
    $region44: #{lstm_forward_seq.1} parent=1 // pred_region
      %131 = vsyncadd [#allocation15], 0
      %s133 = sshll.u32 %s10, 4
      %s134 = int_to_ptr.hbm [resolvable:$true] %s133
      %s135 = sshll.u32 [#allocation16], 4
      %s136 = int_to_ptr.vmem [resolvable:$true] %s135
      %138 = dma.hbm_to_vmem [thread:$0]  %s134, 16, %s136, [#allocation15]
    $region45: #{lstm_forward_seq.1} parent=1 // pred_fallthru
      _
    // Predicated region
    $region46: #{lstm_forward_seq.1} parent=1 // pred_check
      _
    $region47: #{lstm_forward_seq.1} parent=1 // pred_check_branch
      %140 = sbr.rel (0) target = $region49
    $region48: #{lstm_forward_seq.1} parent=1 // pred_region
      %142 = dma.done [#allocation3], 128
    $region49: #{lstm_forward_seq.1} parent=1 // pred_fallthru
      _
    // Predicated region
    $region50: #{lstm_forward_seq.1} parent=1 // pred_check
      _
    $region51: #{lstm_forward_seq.1} parent=1 // pred_check_branch
      %144 = sbr.rel (0) target = $region53
    $region52: #{lstm_forward_seq.1} parent=1 // pred_region
      %146 = dma.done [#allocation6], 32
    $region53: #{lstm_forward_seq.1} parent=1 // pred_fallthru
      _
    // Predicated region
    $region54: #{lstm_forward_seq.1} parent=1 // pred_check
      _
    $region55: #{lstm_forward_seq.1} parent=1 // pred_check_branch
      %148 = sbr.rel (0) target = $region57
    $region56: #{lstm_forward_seq.1} parent=1 // pred_region
      %150 = dma.done [#allocation6], 32
    $region57: #{lstm_forward_seq.1} parent=1 // pred_fallthru
      _
    // Predicated region
    $region58: #{lstm_forward_seq.1} parent=1 // pred_check
      _
    $region59: #{lstm_forward_seq.1} parent=1 // pred_check_branch
      %152 = sbr.rel (0) target = $region61
    $region60: #{lstm_forward_seq.1} parent=1 // pred_region
      %154 = dma.done [#allocation9], 256
    $region61: #{lstm_forward_seq.1} parent=1 // pred_fallthru
      _
    // Predicated region
    $region62: #{lstm_forward_seq.1} parent=1 // pred_check
      _
    $region63: #{lstm_forward_seq.1} parent=1 // pred_check_branch
      %156 = sbr.rel (0) target = $region65
    $region64: #{lstm_forward_seq.1} parent=1 // pred_region
      %158 = dma.done [#allocation9], 512
    $region65: #{lstm_forward_seq.1} parent=1 // pred_fallthru
      _
    // Predicated region
    $region66: #{lstm_forward_seq.1} parent=1 // pred_check
      _
    $region67: #{lstm_forward_seq.1} parent=1 // pred_check_branch
      %160 = sbr.rel (0) target = $region69
    $region68: #{lstm_forward_seq.1} parent=1 // pred_region
      %162 = dma.done [#allocation12], 512
    $region69: #{lstm_forward_seq.1} parent=1 // pred_fallthru
      _
    // Predicated region
    $region70: #{lstm_forward_seq.1} parent=1 // pred_check
      _
    $region71: #{lstm_forward_seq.1} parent=1 // pred_check_branch
      %164 = sbr.rel (0) target = $region73
    $region72: #{lstm_forward_seq.1} parent=1 // pred_region
      %166 = dma.done [#allocation12], 512
    $region73: #{lstm_forward_seq.1} parent=1 // pred_fallthru
      _
    // Predicated region
    $region74: #{lstm_forward_seq.1} parent=1 // pred_check
      _
    $region75: #{lstm_forward_seq.1} parent=1 // pred_check_branch
      %168 = sbr.rel (0) target = $region77
    $region76: #{lstm_forward_seq.1} parent=1 // pred_region
      %170 = dma.done [#allocation15], 512
    $region77: #{lstm_forward_seq.1} parent=1 // pred_fallthru
      _
    // Predicated region
    $region78: #{lstm_forward_seq.1} parent=1 // pred_check
      _
    $region79: #{lstm_forward_seq.1} parent=1 // pred_check_branch
      %172 = sbr.rel (0) target = $region81
    $region80: #{lstm_forward_seq.1} parent=1 // pred_region
      %174 = dma.done [#allocation15], 16
    $region81: #{lstm_forward_seq.1} parent=1 // pred_fallthru
      _
    %v175 = vld [vmem:[#allocation2] sm:$0xff]
    %v176 = vld [vmem:[#allocation8] sm:$0xff]
    %v177 = vld [vmem:[#allocation8 + $0x8] sm:$0xff]
    %v178 = vld [vmem:[%s5] sm:$0x1]
    %v180 = vperm.slane %v178, 0
    %vm182 = vcmask 130048
    %v184 = vsel %vm182, %v175, 0
    %186 = vmatpush.msra.mxu0 0.0
    %187 = vmatpush.msra.mxu0 0.0
    %188 = vmatpush.msra.mxu0 0.0
    %189 = vmatpush.msra.mxu0 0.0
    %190 = vmatpush.msra.mxu0 0.0
    %191 = vmatpush.msra.mxu0 0.0
    %192 = vmatpush.msra.mxu0 0.0
    %193 = vmatpush.msra.mxu0 0.0
    %194 = vmatpush.msra.mxu0 0.0
    %195 = vmatpush.msra.mxu0 0.0
    %196 = vmatpush.msra.mxu0 0.0
    %197 = vmatpush.msra.mxu0 0.0
    %198 = vmatpush.msra.mxu0 0.0
    %199 = vmatpush.msra.mxu0 0.0
    %200 = vmatpush.msra.mxu0 %v177
    %201 = vmatpush.msra.mxu0 %v176
    %202 = vmatmul.f32.gmra.mxu0 %v184
    %v203 = vpop.f32.mrf.mxu0
    %v204 = vadd.f32 %v180, %v203
    %205 = vdwg.mxu0
    %v206 = vld [vmem:[#allocation10] sm:$0xff]
    %v207 = vld [vmem:[#allocation10 + $0x8] sm:$0xff]
    %v208 = vld [vmem:[#allocation10 + $0x10] sm:$0xff]
    %v209 = vld [vmem:[#allocation10 + $0x18] sm:$0xff]
    %v210 = vld [vmem:[#allocation11] sm:$0xff]
    %v211 = vld [vmem:[#allocation11 + $0x8] sm:$0xff]
    %v212 = vld [vmem:[#allocation11 + $0x10] sm:$0xff]
    %v213 = vld [vmem:[#allocation11 + $0x18] sm:$0xff]
    %v214 = vld [vmem:[#allocation13] sm:$0xff]
    %v215 = vld [vmem:[#allocation13 + $0x8] sm:$0xff]
    %v216 = vld [vmem:[#allocation13 + $0x10] sm:$0xff]
    %v217 = vld [vmem:[#allocation13 + $0x18] sm:$0xff]
    %v218 = vld [vmem:[%s8] sm:$0x1]
    %v219 = vld [vmem:[#allocation14] sm:$0xff]
    %v220 = vld [vmem:[#allocation14 + $0x8] sm:$0xff]
    %v221 = vld [vmem:[#allocation14 + $0x10] sm:$0xff]
    %v222 = vld [vmem:[#allocation14 + $0x18] sm:$0xff]
    %v223 = vld [vmem:[#allocation16] sm:$0x1]
    %v224 = vld [vmem:[#allocation5 + $0x1] sm:$0x1]
    %v225 = vld [vmem:[#allocation7 + $0x1] sm:$0x1]
    %v226 = vld [vmem:[#allocation5] sm:$0x1]
    %v227 = vld [vmem:[#allocation7] sm:$0x1]
    %vm228 = vcmask 261120
    %v230 = vsel %vm228, %v224, 0
    %232 = vmatpush.msra.mxu0 0.0
    %233 = vmatpush.msra.mxu0 0.0
    %234 = vmatpush.msra.mxu0 0.0
    %235 = vmatpush.msra.mxu0 0.0
    %236 = vmatpush.msra.mxu0 0.0
    %237 = vmatpush.msra.mxu0 0.0
    %238 = vmatpush.msra.mxu0 0.0
    %239 = vmatpush.msra.mxu0 0.0
    %240 = vmatpush.msra.mxu0 0.0
    %241 = vmatpush.msra.mxu0 0.0
    %242 = vmatpush.msra.mxu0 0.0
    %243 = vmatpush.msra.mxu0 0.0
    %244 = vmatpush.msra.mxu0 %v209
    %245 = vmatpush.msra.mxu0 %v208
    %246 = vmatpush.msra.mxu0 %v207
    %247 = vmatpush.msra.mxu0 %v206
    %248 = vmatmul.f32.gmra.mxu0 %v230
    %v249 = vpop.f32.mrf.mxu0
    %v250 = vadd.f32 0.0, %v249
    %251 = vdwg.mxu0
    %v252 = vadd.f32 %v204, %v250
    %v253 = vxor.u32 %v252, 2147483648
    %v254 = vmul.f32 %v253, 1.442695
    %v255 = vpow.pop %v254
    %v256 = vadd.f32 %v255, 1.0
    %v257 = vrcp.pop %v256
    %v258 = vmul.f32 %v256, %v257
    %v259 = vsub.f32 1.0, %v258
    %v260 = vmul.f32 %v257, %v259
    %v261 = vadd.f32 %v257, %v260
    %vm262 = vweird.f32 %v256
    %vm263 = vweird.f32 %v257
    %vm264 = vmor %vm262, %vm263
    %v265 = vsel %vm264, %v257, %v261
    %v266 = vand.u32 2147483647, %v256
    %vm267 = vcmp.eq.f32.partialorder %v266, 8.507059e+37
    %v268 = vand.u32 %v256, 2147483648
    %v269 = vor.u32 1.1754944e-38, %v268
    %v270 = vsel %vm267, %v269, %v265
    %v271 = vmul.f32 1.0, %v270
    %v272 = vtanh.pop %v252
    %274 = vrot.lane.b32.xlu0 %v225, 32
    %v275 = vpop.permute.xlu0 %274
    %v277 = vmul.f32 %v271, %v275
    %279 = vrot.lane.b32.xlu0 %v272, 64
    %v280 = vpop.permute.xlu0 %279
    %v282 = vmul.f32 %v271, %v280
    %284 = vrot.lane.b32.xlu0 %v282, 32
    %v285 = vpop.permute.xlu0 %284
    %v287 = vadd.f32 %v277, %v285
    %v288 = vtanh.pop %v287
    %290 = vrot.lane.b32.xlu0 %v288, 64
    %v291 = vpop.permute.xlu0 %290
    %v293 = vmul.f32 %v271, %v291
    %v295 = vsel %vm228, %v226, 0
    %297 = vmatpush.msra.mxu0 0.0
    %298 = vmatpush.msra.mxu0 0.0
    %299 = vmatpush.msra.mxu0 0.0
    %300 = vmatpush.msra.mxu0 0.0
    %301 = vmatpush.msra.mxu0 0.0
    %302 = vmatpush.msra.mxu0 0.0
    %303 = vmatpush.msra.mxu0 0.0
    %304 = vmatpush.msra.mxu0 0.0
    %305 = vmatpush.msra.mxu0 0.0
    %306 = vmatpush.msra.mxu0 0.0
    %307 = vmatpush.msra.mxu0 0.0
    %308 = vmatpush.msra.mxu0 0.0
    %309 = vmatpush.msra.mxu0 %v217
    %310 = vmatpush.msra.mxu0 %v216
    %311 = vmatpush.msra.mxu0 %v215
    %312 = vmatpush.msra.mxu0 %v214
    %313 = vmatmul.f32.gmra.mxu0 %v295
    %v314 = vpop.f32.mrf.mxu0
    %v315 = vadd.f32 0.0, %v314
    %316 = vdwg.mxu0
    %318 = vrot.lane.b32.xlu0 %v287, 96
    %v319 = vpop.permute.xlu0 %318
    %v320 = vsel %vm228, %v319, 0
    %322 = vmatpush.msra.mxu0 0.0
    %323 = vmatpush.msra.mxu0 0.0
    %324 = vmatpush.msra.mxu0 0.0
    %325 = vmatpush.msra.mxu0 0.0
    %326 = vmatpush.msra.mxu0 0.0
    %327 = vmatpush.msra.mxu0 0.0
    %328 = vmatpush.msra.mxu0 0.0
    %329 = vmatpush.msra.mxu0 0.0
    %330 = vmatpush.msra.mxu0 0.0
    %331 = vmatpush.msra.mxu0 0.0
    %332 = vmatpush.msra.mxu0 0.0
    %333 = vmatpush.msra.mxu0 0.0
    %334 = vmatpush.msra.mxu0 %v213
    %335 = vmatpush.msra.mxu0 %v212
    %336 = vmatpush.msra.mxu0 %v211
    %337 = vmatpush.msra.mxu0 %v210
    %338 = vmatmul.f32.gmra.mxu0 %v320
    %v339 = vpop.f32.mrf.mxu0
    %v340 = vadd.f32 %v315, %v339
    %341 = vdwg.mxu0
    %v342 = vadd.f32 %v340, %v218
    %v343 = vxor.u32 %v342, 2147483648
    %v344 = vmul.f32 %v343, 1.442695
    %v345 = vpow.pop %v344
    %v346 = vadd.f32 %v345, 1.0
    %v347 = vrcp.pop %v346
    %v348 = vmul.f32 %v346, %v347
    %v349 = vsub.f32 1.0, %v348
    %v350 = vmul.f32 %v347, %v349
    %v351 = vadd.f32 %v347, %v350
    %vm352 = vweird.f32 %v346
    %vm353 = vweird.f32 %v347
    %vm354 = vmor %vm352, %vm353
    %v355 = vsel %vm354, %v347, %v351
    %v356 = vand.u32 2147483647, %v346
    %vm357 = vcmp.eq.f32.partialorder %v356, 8.507059e+37
    %v358 = vand.u32 %v346, 2147483648
    %v359 = vor.u32 1.1754944e-38, %v358
    %v360 = vsel %vm357, %v359, %v355
    %v361 = vmul.f32 1.0, %v360
    %v362 = vtanh.pop %v342
    %364 = vrot.lane.b32.xlu0 %v227, 32
    %v365 = vpop.permute.xlu0 %364
    %v367 = vmul.f32 %v361, %v365
    %369 = vrot.lane.b32.xlu0 %v362, 64
    %v370 = vpop.permute.xlu0 %369
    %v372 = vmul.f32 %v361, %v370
    %374 = vrot.lane.b32.xlu0 %v372, 32
    %v375 = vpop.permute.xlu0 %374
    %v377 = vadd.f32 %v367, %v375
    %v378 = vtanh.pop %v377
    %380 = vrot.lane.b32.xlu0 %v378, 64
    %v381 = vpop.permute.xlu0 %380
    %v383 = vmul.f32 %v361, %v381
    %385 = vrot.lane.b32.xlu0 %v377, 96
    %v386 = vpop.permute.xlu0 %385
    %v387 = vsel %vm228, %v386, 0
    %389 = vmatpush.msra.mxu0 0.0
    %390 = vmatpush.msra.mxu0 0.0
    %391 = vmatpush.msra.mxu0 0.0
    %392 = vmatpush.msra.mxu0 0.0
    %393 = vmatpush.msra.mxu0 0.0
    %394 = vmatpush.msra.mxu0 0.0
    %395 = vmatpush.msra.mxu0 0.0
    %396 = vmatpush.msra.mxu0 0.0
    %397 = vmatpush.msra.mxu0 0.0
    %398 = vmatpush.msra.mxu0 0.0
    %399 = vmatpush.msra.mxu0 0.0
    %400 = vmatpush.msra.mxu0 0.0
    %401 = vmatpush.msra.mxu0 %v222
    %402 = vmatpush.msra.mxu0 %v221
    %403 = vmatpush.msra.mxu0 %v220
    %404 = vmatpush.msra.mxu0 %v219
    %405 = vmatmul.f32.gmra.mxu0 %v387
    %v406 = vpop.f32.mrf.mxu0
    %v407 = vadd.f32 %v223, %v406
    %408 = vdwg.mxu0
    %vm409 = vcmask 122880
    %v410 = vsel %vm409, %v407, -inf
    %411 = vmax.xlane.f32.xlu0 %v410
    %v412 = vpop.xlane.xlu0 %411
    %v413 = vsub.f32 %v407, %v412
    %v414 = vmul.f32 %v413, 1.442695
    %v415 = vpow.pop %v414
    %v416 = vsel %vm409, %v415, 0.0
    %417 = vadd.xlane.f32.xlu0 %v416
    %v418 = vpop.xlane.xlu0 %417
    %v419 = vlog2.pop %v418
    %v420 = vmul.f32 %v419, 0.6931472
    %v421 = vadd.f32 %v412, %v420
    %v422 = vsub.f32 %v407, %v421
    %423 = vst.msk [vmem:[#allocation17] sm:$0x1] %vm409, %v422
    %425 = vrot.lane.b32.xlu0 %v383, 32
    %v426 = vpop.permute.xlu0 %425
    %v427 = vsel %vm228, %v426, 0
    %429 = vmatpush.msra.mxu0 0.0
    %430 = vmatpush.msra.mxu0 0.0
    %431 = vmatpush.msra.mxu0 0.0
    %432 = vmatpush.msra.mxu0 0.0
    %433 = vmatpush.msra.mxu0 0.0
    %434 = vmatpush.msra.mxu0 0.0
    %435 = vmatpush.msra.mxu0 0.0
    %436 = vmatpush.msra.mxu0 0.0
    %437 = vmatpush.msra.mxu0 0.0
    %438 = vmatpush.msra.mxu0 0.0
    %439 = vmatpush.msra.mxu0 0.0
    %440 = vmatpush.msra.mxu0 0.0
    %441 = vmatpush.msra.mxu0 %v209
    %442 = vmatpush.msra.mxu0 %v208
    %443 = vmatpush.msra.mxu0 %v207
    %444 = vmatpush.msra.mxu0 %v206
    %445 = vmatmul.f32.gmra.mxu0 %v427
    %v446 = vpop.f32.mrf.mxu0
    %v447 = vadd.f32 0.0, %v446
    %448 = vdwg.mxu0
    %v450 = vrot.slane %v447, 7
    %v452 = vadd.f32 %v204, %v450
    %v453 = vxor.u32 %v452, 2147483648
    %v454 = vmul.f32 %v453, 1.442695
    %v455 = vpow.pop %v454
    %v456 = vadd.f32 %v455, 1.0
    %v457 = vrcp.pop %v456
    %v458 = vmul.f32 %v456, %v457
    %v459 = vsub.f32 1.0, %v458
    %v460 = vmul.f32 %v457, %v459
    %v461 = vadd.f32 %v457, %v460
    %vm462 = vweird.f32 %v456
    %vm463 = vweird.f32 %v457
    %vm464 = vmor %vm462, %vm463
    %v465 = vsel %vm464, %v457, %v461
    %v466 = vand.u32 2147483647, %v456
    %vm467 = vcmp.eq.f32.partialorder %v466, 8.507059e+37
    %v468 = vand.u32 %v456, 2147483648
    %v469 = vor.u32 1.1754944e-38, %v468
    %v470 = vsel %vm467, %v469, %v465
    %v471 = vmul.f32 1.0, %v470
    %v472 = vtanh.pop %v452
    %v473 = vrot.slane %v377, 7
    %v475 = vmul.f32 %v471, %v473
    %477 = vrot.lane.b32.xlu0 %v472, 64
    %v478 = vpop.permute.xlu0 %477
    %v480 = vmul.f32 %v471, %v478
    %482 = vrot.lane.b32.xlu0 %v480, 32
    %v483 = vpop.permute.xlu0 %482
    %v485 = vadd.f32 %v475, %v483
    %v486 = vtanh.pop %v485
    %488 = vrot.lane.b32.xlu0 %v486, 64
    %v489 = vpop.permute.xlu0 %488
    %v491 = vmul.f32 %v471, %v489
    %493 = vrot.lane.b32.xlu0 %v293, 32
    %v494 = vpop.permute.xlu0 %493
    %v495 = vsel %vm228, %v494, 0
    %497 = vmatpush.msra.mxu0 0.0
    %498 = vmatpush.msra.mxu0 0.0
    %499 = vmatpush.msra.mxu0 0.0
    %500 = vmatpush.msra.mxu0 0.0
    %501 = vmatpush.msra.mxu0 0.0
    %502 = vmatpush.msra.mxu0 0.0
    %503 = vmatpush.msra.mxu0 0.0
    %504 = vmatpush.msra.mxu0 0.0
    %505 = vmatpush.msra.mxu0 0.0
    %506 = vmatpush.msra.mxu0 0.0
    %507 = vmatpush.msra.mxu0 0.0
    %508 = vmatpush.msra.mxu0 0.0
    %509 = vmatpush.msra.mxu0 %v217
    %510 = vmatpush.msra.mxu0 %v216
    %511 = vmatpush.msra.mxu0 %v215
    %512 = vmatpush.msra.mxu0 %v214
    %513 = vmatmul.f32.gmra.mxu0 %v495
    %v514 = vpop.f32.mrf.mxu0
    %v515 = vadd.f32 0.0, %v514
    %516 = vdwg.mxu0
    %v518 = vrot.slane %v485, 1
    %519 = vrot.lane.b32.xlu0 %v518, 96
    %v520 = vpop.permute.xlu0 %519
    %v521 = vsel %vm228, %v520, 0
    %523 = vmatpush.msra.mxu0 0.0
    %524 = vmatpush.msra.mxu0 0.0
    %525 = vmatpush.msra.mxu0 0.0
    %526 = vmatpush.msra.mxu0 0.0
    %527 = vmatpush.msra.mxu0 0.0
    %528 = vmatpush.msra.mxu0 0.0
    %529 = vmatpush.msra.mxu0 0.0
    %530 = vmatpush.msra.mxu0 0.0
    %531 = vmatpush.msra.mxu0 0.0
    %532 = vmatpush.msra.mxu0 0.0
    %533 = vmatpush.msra.mxu0 0.0
    %534 = vmatpush.msra.mxu0 0.0
    %535 = vmatpush.msra.mxu0 %v213
    %536 = vmatpush.msra.mxu0 %v212
    %537 = vmatpush.msra.mxu0 %v211
    %538 = vmatpush.msra.mxu0 %v210
    %539 = vmatmul.f32.gmra.mxu0 %v521
    %v540 = vpop.f32.mrf.mxu0
    %v541 = vadd.f32 %v515, %v540
    %542 = vdwg.mxu0
    %v543 = vadd.f32 %v541, %v218
    %v544 = vxor.u32 %v543, 2147483648
    %v545 = vmul.f32 %v544, 1.442695
    %v546 = vpow.pop %v545
    %v547 = vadd.f32 %v546, 1.0
    %v548 = vrcp.pop %v547
    %v549 = vmul.f32 %v547, %v548
    %v550 = vsub.f32 1.0, %v549
    %v551 = vmul.f32 %v548, %v550
    %v552 = vadd.f32 %v548, %v551
    %vm553 = vweird.f32 %v547
    %vm554 = vweird.f32 %v548
    %vm555 = vmor %vm553, %vm554
    %v556 = vsel %vm555, %v548, %v552
    %v557 = vand.u32 2147483647, %v547
    %vm558 = vcmp.eq.f32.partialorder %v557, 8.507059e+37
    %v559 = vand.u32 %v547, 2147483648
    %v560 = vor.u32 1.1754944e-38, %v559
    %v561 = vsel %vm558, %v560, %v556
    %v562 = vmul.f32 1.0, %v561
    %v563 = vtanh.pop %v543
    %v564 = vmul.f32 %v562, %v287
    %566 = vrot.lane.b32.xlu0 %v563, 64
    %v567 = vpop.permute.xlu0 %566
    %v569 = vmul.f32 %v562, %v567
    %571 = vrot.lane.b32.xlu0 %v569, 32
    %v572 = vpop.permute.xlu0 %571
    %v574 = vadd.f32 %v564, %v572
    %v575 = vtanh.pop %v574
    %577 = vrot.lane.b32.xlu0 %v575, 64
    %v578 = vpop.permute.xlu0 %577
    %v580 = vmul.f32 %v562, %v578
    %582 = vrot.lane.b32.xlu0 %v574, 96
    %v583 = vpop.permute.xlu0 %582
    %v584 = vsel %vm228, %v583, 0
    %586 = vmatpush.msra.mxu0 0.0
    %587 = vmatpush.msra.mxu0 0.0
    %588 = vmatpush.msra.mxu0 0.0
    %589 = vmatpush.msra.mxu0 0.0
    %590 = vmatpush.msra.mxu0 0.0
    %591 = vmatpush.msra.mxu0 0.0
    %592 = vmatpush.msra.mxu0 0.0
    %593 = vmatpush.msra.mxu0 0.0
    %594 = vmatpush.msra.mxu0 0.0
    %595 = vmatpush.msra.mxu0 0.0
    %596 = vmatpush.msra.mxu0 0.0
    %597 = vmatpush.msra.mxu0 0.0
    %598 = vmatpush.msra.mxu0 %v222
    %599 = vmatpush.msra.mxu0 %v221
    %600 = vmatpush.msra.mxu0 %v220
    %601 = vmatpush.msra.mxu0 %v219
    %602 = vmatmul.f32.gmra.mxu0 %v584
    %v603 = vpop.f32.mrf.mxu0
    %v604 = vadd.f32 %v223, %v603
    %605 = vdwg.mxu0
    %v606 = vsel %vm409, %v604, -inf
    %607 = vmax.xlane.f32.xlu0 %v606
    %v608 = vpop.xlane.xlu0 %607
    %v609 = vsub.f32 %v604, %v608
    %v610 = vmul.f32 %v609, 1.442695
    %v611 = vpow.pop %v610
    %v612 = vsel %vm409, %v611, 0.0
    %613 = vadd.xlane.f32.xlu0 %v612
    %v614 = vpop.xlane.xlu0 %613
    %v615 = vlog2.pop %v614
    %v616 = vmul.f32 %v615, 0.6931472
    %v617 = vadd.f32 %v608, %v616
    %v618 = vsub.f32 %v604, %v617
    %619 = vst.msk [vmem:[#allocation17 + $0x1] sm:$0x1] %vm409, %v618
    %621 = vrot.lane.b32.xlu0 %v580, 32
    %v622 = vpop.permute.xlu0 %621
    %v623 = vsel %vm228, %v622, 0
    %625 = vmatpush.msra.mxu0 0.0
    %626 = vmatpush.msra.mxu0 0.0
    %627 = vmatpush.msra.mxu0 0.0
    %628 = vmatpush.msra.mxu0 0.0
    %629 = vmatpush.msra.mxu0 0.0
    %630 = vmatpush.msra.mxu0 0.0
    %631 = vmatpush.msra.mxu0 0.0
    %632 = vmatpush.msra.mxu0 0.0
    %633 = vmatpush.msra.mxu0 0.0
    %634 = vmatpush.msra.mxu0 0.0
    %635 = vmatpush.msra.mxu0 0.0
    %636 = vmatpush.msra.mxu0 0.0
    %637 = vmatpush.msra.mxu0 %v209
    %638 = vmatpush.msra.mxu0 %v208
    %639 = vmatpush.msra.mxu0 %v207
    %640 = vmatpush.msra.mxu0 %v206
    %641 = vmatmul.f32.gmra.mxu0 %v623
    %v642 = vpop.f32.mrf.mxu0
    %v643 = vadd.f32 0.0, %v642
    %644 = vdwg.mxu0
    %v646 = vrot.slane %v643, 6
    %v648 = vadd.f32 %v204, %v646
    %v649 = vxor.u32 %v648, 2147483648
    %v650 = vmul.f32 %v649, 1.442695
    %v651 = vpow.pop %v650
    %v652 = vadd.f32 %v651, 1.0
    %v653 = vrcp.pop %v652
    %v654 = vmul.f32 %v652, %v653
    %v655 = vsub.f32 1.0, %v654
    %v656 = vmul.f32 %v653, %v655
    %v657 = vadd.f32 %v653, %v656
    %vm658 = vweird.f32 %v652
    %vm659 = vweird.f32 %v653
    %vm660 = vmor %vm658, %vm659
    %v661 = vsel %vm660, %v653, %v657
    %v662 = vand.u32 2147483647, %v652
    %vm663 = vcmp.eq.f32.partialorder %v662, 8.507059e+37
    %v664 = vand.u32 %v652, 2147483648
    %v665 = vor.u32 1.1754944e-38, %v664
    %v666 = vsel %vm663, %v665, %v661
    %v667 = vmul.f32 1.0, %v666
    %v668 = vtanh.pop %v648
    %v669 = vrot.slane %v574, 6
    %v671 = vmul.f32 %v667, %v669
    %673 = vrot.lane.b32.xlu0 %v668, 64
    %v674 = vpop.permute.xlu0 %673
    %v676 = vmul.f32 %v667, %v674
    %678 = vrot.lane.b32.xlu0 %v676, 32
    %v679 = vpop.permute.xlu0 %678
    %v681 = vadd.f32 %v671, %v679
    %v682 = vtanh.pop %v681
    %684 = vrot.lane.b32.xlu0 %v682, 64
    %v685 = vpop.permute.xlu0 %684
    %v687 = vmul.f32 %v667, %v685
    %v689 = vrot.slane %v491, 1
    %690 = vrot.lane.b32.xlu0 %v689, 32
    %v691 = vpop.permute.xlu0 %690
    %v692 = vsel %vm228, %v691, 0
    %694 = vmatpush.msra.mxu0 0.0
    %695 = vmatpush.msra.mxu0 0.0
    %696 = vmatpush.msra.mxu0 0.0
    %697 = vmatpush.msra.mxu0 0.0
    %698 = vmatpush.msra.mxu0 0.0
    %699 = vmatpush.msra.mxu0 0.0
    %700 = vmatpush.msra.mxu0 0.0
    %701 = vmatpush.msra.mxu0 0.0
    %702 = vmatpush.msra.mxu0 0.0
    %703 = vmatpush.msra.mxu0 0.0
    %704 = vmatpush.msra.mxu0 0.0
    %705 = vmatpush.msra.mxu0 0.0
    %706 = vmatpush.msra.mxu0 %v217
    %707 = vmatpush.msra.mxu0 %v216
    %708 = vmatpush.msra.mxu0 %v215
    %709 = vmatpush.msra.mxu0 %v214
    %710 = vmatmul.f32.gmra.mxu0 %v692
    %v711 = vpop.f32.mrf.mxu0
    %v712 = vadd.f32 0.0, %v711
    %713 = vdwg.mxu0
    %v715 = vrot.slane %v681, 2
    %716 = vrot.lane.b32.xlu0 %v715, 96
    %v717 = vpop.permute.xlu0 %716
    %v718 = vsel %vm228, %v717, 0
    %720 = vmatpush.msra.mxu0 0.0
    %721 = vmatpush.msra.mxu0 0.0
    %722 = vmatpush.msra.mxu0 0.0
    %723 = vmatpush.msra.mxu0 0.0
    %724 = vmatpush.msra.mxu0 0.0
    %725 = vmatpush.msra.mxu0 0.0
    %726 = vmatpush.msra.mxu0 0.0
    %727 = vmatpush.msra.mxu0 0.0
    %728 = vmatpush.msra.mxu0 0.0
    %729 = vmatpush.msra.mxu0 0.0
    %730 = vmatpush.msra.mxu0 0.0
    %731 = vmatpush.msra.mxu0 0.0
    %732 = vmatpush.msra.mxu0 %v213
    %733 = vmatpush.msra.mxu0 %v212
    %734 = vmatpush.msra.mxu0 %v211
    %735 = vmatpush.msra.mxu0 %v210
    %736 = vmatmul.f32.gmra.mxu0 %v718
    %v737 = vpop.f32.mrf.mxu0
    %v738 = vadd.f32 %v712, %v737
    %739 = vdwg.mxu0
    %v740 = vadd.f32 %v738, %v218
    %v741 = vxor.u32 %v740, 2147483648
    %v742 = vmul.f32 %v741, 1.442695
    %v743 = vpow.pop %v742
    %v744 = vadd.f32 %v743, 1.0
    %v745 = vrcp.pop %v744
    %v746 = vmul.f32 %v744, %v745
    %v747 = vsub.f32 1.0, %v746
    %v748 = vmul.f32 %v745, %v747
    %v749 = vadd.f32 %v745, %v748
    %vm750 = vweird.f32 %v744
    %vm751 = vweird.f32 %v745
    %vm752 = vmor %vm750, %vm751
    %v753 = vsel %vm752, %v745, %v749
    %v754 = vand.u32 2147483647, %v744
    %vm755 = vcmp.eq.f32.partialorder %v754, 8.507059e+37
    %v756 = vand.u32 %v744, 2147483648
    %v757 = vor.u32 1.1754944e-38, %v756
    %v758 = vsel %vm755, %v757, %v753
    %v759 = vmul.f32 1.0, %v758
    %v760 = vtanh.pop %v740
    %v762 = vmul.f32 %v759, %v518
    %764 = vrot.lane.b32.xlu0 %v760, 64
    %v765 = vpop.permute.xlu0 %764
    %v767 = vmul.f32 %v759, %v765
    %769 = vrot.lane.b32.xlu0 %v767, 32
    %v770 = vpop.permute.xlu0 %769
    %v772 = vadd.f32 %v762, %v770
    %v773 = vtanh.pop %v772
    %775 = vrot.lane.b32.xlu0 %v773, 64
    %v776 = vpop.permute.xlu0 %775
    %v778 = vmul.f32 %v759, %v776
    %780 = vrot.lane.b32.xlu0 %v772, 96
    %v781 = vpop.permute.xlu0 %780
    %v782 = vsel %vm228, %v781, 0
    %784 = vmatpush.msra.mxu0 0.0
    %785 = vmatpush.msra.mxu0 0.0
    %786 = vmatpush.msra.mxu0 0.0
    %787 = vmatpush.msra.mxu0 0.0
    %788 = vmatpush.msra.mxu0 0.0
    %789 = vmatpush.msra.mxu0 0.0
    %790 = vmatpush.msra.mxu0 0.0
    %791 = vmatpush.msra.mxu0 0.0
    %792 = vmatpush.msra.mxu0 0.0
    %793 = vmatpush.msra.mxu0 0.0
    %794 = vmatpush.msra.mxu0 0.0
    %795 = vmatpush.msra.mxu0 0.0
    %796 = vmatpush.msra.mxu0 %v222
    %797 = vmatpush.msra.mxu0 %v221
    %798 = vmatpush.msra.mxu0 %v220
    %799 = vmatpush.msra.mxu0 %v219
    %800 = vmatmul.f32.gmra.mxu0 %v782
    %v801 = vpop.f32.mrf.mxu0
    %v802 = vadd.f32 %v223, %v801
    %803 = vdwg.mxu0
    %v804 = vsel %vm409, %v802, -inf
    %805 = vmax.xlane.f32.xlu0 %v804
    %v806 = vpop.xlane.xlu0 %805
    %v807 = vsub.f32 %v802, %v806
    %v808 = vmul.f32 %v807, 1.442695
    %v809 = vpow.pop %v808
    %v810 = vsel %vm409, %v809, 0.0
    %811 = vadd.xlane.f32.xlu0 %v810
    %v812 = vpop.xlane.xlu0 %811
    %v813 = vlog2.pop %v812
    %v814 = vmul.f32 %v813, 0.6931472
    %v815 = vadd.f32 %v806, %v814
    %v816 = vsub.f32 %v802, %v815
    %817 = vst.msk [vmem:[#allocation17 + $0x2] sm:$0x1] %vm409, %v816
    %819 = vrot.lane.b32.xlu0 %v778, 32
    %v820 = vpop.permute.xlu0 %819
    %v821 = vsel %vm228, %v820, 0
    %823 = vmatpush.msra.mxu0 0.0
    %824 = vmatpush.msra.mxu0 0.0
    %825 = vmatpush.msra.mxu0 0.0
    %826 = vmatpush.msra.mxu0 0.0
    %827 = vmatpush.msra.mxu0 0.0
    %828 = vmatpush.msra.mxu0 0.0
    %829 = vmatpush.msra.mxu0 0.0
    %830 = vmatpush.msra.mxu0 0.0
    %831 = vmatpush.msra.mxu0 0.0
    %832 = vmatpush.msra.mxu0 0.0
    %833 = vmatpush.msra.mxu0 0.0
    %834 = vmatpush.msra.mxu0 0.0
    %835 = vmatpush.msra.mxu0 %v209
    %836 = vmatpush.msra.mxu0 %v208
    %837 = vmatpush.msra.mxu0 %v207
    %838 = vmatpush.msra.mxu0 %v206
    %839 = vmatmul.f32.gmra.mxu0 %v821
    %v840 = vpop.f32.mrf.mxu0
    %v841 = vadd.f32 0.0, %v840
    %842 = vdwg.mxu0
    %v844 = vrot.slane %v841, 5
    %v846 = vadd.f32 %v204, %v844
    %v847 = vxor.u32 %v846, 2147483648
    %v848 = vmul.f32 %v847, 1.442695
    %v849 = vpow.pop %v848
    %v850 = vadd.f32 %v849, 1.0
    %v851 = vrcp.pop %v850
    %v852 = vmul.f32 %v850, %v851
    %v853 = vsub.f32 1.0, %v852
    %v854 = vmul.f32 %v851, %v853
    %v855 = vadd.f32 %v851, %v854
    %vm856 = vweird.f32 %v850
    %vm857 = vweird.f32 %v851
    %vm858 = vmor %vm856, %vm857
    %v859 = vsel %vm858, %v851, %v855
    %v860 = vand.u32 2147483647, %v850
    %vm861 = vcmp.eq.f32.partialorder %v860, 8.507059e+37
    %v862 = vand.u32 %v850, 2147483648
    %v863 = vor.u32 1.1754944e-38, %v862
    %v864 = vsel %vm861, %v863, %v859
    %v865 = vmul.f32 1.0, %v864
    %v866 = vtanh.pop %v846
    %v867 = vrot.slane %v772, 5
    %v869 = vmul.f32 %v865, %v867
    %871 = vrot.lane.b32.xlu0 %v866, 64
    %v872 = vpop.permute.xlu0 %871
    %v874 = vmul.f32 %v865, %v872
    %876 = vrot.lane.b32.xlu0 %v874, 32
    %v877 = vpop.permute.xlu0 %876
    %v879 = vadd.f32 %v869, %v877
    %v880 = vtanh.pop %v879
    %882 = vrot.lane.b32.xlu0 %v880, 64
    %v883 = vpop.permute.xlu0 %882
    %v885 = vmul.f32 %v865, %v883
    %v887 = vrot.slane %v687, 2
    %888 = vrot.lane.b32.xlu0 %v887, 32
    %v889 = vpop.permute.xlu0 %888
    %v890 = vsel %vm228, %v889, 0
    %892 = vmatpush.msra.mxu0 0.0
    %893 = vmatpush.msra.mxu0 0.0
    %894 = vmatpush.msra.mxu0 0.0
    %895 = vmatpush.msra.mxu0 0.0
    %896 = vmatpush.msra.mxu0 0.0
    %897 = vmatpush.msra.mxu0 0.0
    %898 = vmatpush.msra.mxu0 0.0
    %899 = vmatpush.msra.mxu0 0.0
    %900 = vmatpush.msra.mxu0 0.0
    %901 = vmatpush.msra.mxu0 0.0
    %902 = vmatpush.msra.mxu0 0.0
    %903 = vmatpush.msra.mxu0 0.0
    %904 = vmatpush.msra.mxu0 %v217
    %905 = vmatpush.msra.mxu0 %v216
    %906 = vmatpush.msra.mxu0 %v215
    %907 = vmatpush.msra.mxu0 %v214
    %908 = vmatmul.f32.gmra.mxu0 %v890
    %v909 = vpop.f32.mrf.mxu0
    %v910 = vadd.f32 0.0, %v909
    %911 = vdwg.mxu0
    %v913 = vrot.slane %v879, 3
    %914 = vrot.lane.b32.xlu0 %v913, 96
    %v915 = vpop.permute.xlu0 %914
    %v916 = vsel %vm228, %v915, 0
    %918 = vmatpush.msra.mxu0 0.0
    %919 = vmatpush.msra.mxu0 0.0
    %920 = vmatpush.msra.mxu0 0.0
    %921 = vmatpush.msra.mxu0 0.0
    %922 = vmatpush.msra.mxu0 0.0
    %923 = vmatpush.msra.mxu0 0.0
    %924 = vmatpush.msra.mxu0 0.0
    %925 = vmatpush.msra.mxu0 0.0
    %926 = vmatpush.msra.mxu0 0.0
    %927 = vmatpush.msra.mxu0 0.0
    %928 = vmatpush.msra.mxu0 0.0
    %929 = vmatpush.msra.mxu0 0.0
    %930 = vmatpush.msra.mxu0 %v213
    %931 = vmatpush.msra.mxu0 %v212
    %932 = vmatpush.msra.mxu0 %v211
    %933 = vmatpush.msra.mxu0 %v210
    %934 = vmatmul.f32.gmra.mxu0 %v916
    %v935 = vpop.f32.mrf.mxu0
    %v936 = vadd.f32 %v910, %v935
    %937 = vdwg.mxu0
    %v938 = vadd.f32 %v936, %v218
    %v939 = vxor.u32 %v938, 2147483648
    %v940 = vmul.f32 %v939, 1.442695
    %v941 = vpow.pop %v940
    %v942 = vadd.f32 %v941, 1.0
    %v943 = vrcp.pop %v942
    %v944 = vmul.f32 %v942, %v943
    %v945 = vsub.f32 1.0, %v944
    %v946 = vmul.f32 %v943, %v945
    %v947 = vadd.f32 %v943, %v946
    %vm948 = vweird.f32 %v942
    %vm949 = vweird.f32 %v943
    %vm950 = vmor %vm948, %vm949
    %v951 = vsel %vm950, %v943, %v947
    %v952 = vand.u32 2147483647, %v942
    %vm953 = vcmp.eq.f32.partialorder %v952, 8.507059e+37
    %v954 = vand.u32 %v942, 2147483648
    %v955 = vor.u32 1.1754944e-38, %v954
    %v956 = vsel %vm953, %v955, %v951
    %v957 = vmul.f32 1.0, %v956
    %v958 = vtanh.pop %v938
    %v960 = vmul.f32 %v957, %v715
    %962 = vrot.lane.b32.xlu0 %v958, 64
    %v963 = vpop.permute.xlu0 %962
    %v965 = vmul.f32 %v957, %v963
    %967 = vrot.lane.b32.xlu0 %v965, 32
    %v968 = vpop.permute.xlu0 %967
    %v970 = vadd.f32 %v960, %v968
    %v971 = vtanh.pop %v970
    %973 = vrot.lane.b32.xlu0 %v971, 64
    %v974 = vpop.permute.xlu0 %973
    %v976 = vmul.f32 %v957, %v974
    %978 = vrot.lane.b32.xlu0 %v970, 96
    %v979 = vpop.permute.xlu0 %978
    %v980 = vsel %vm228, %v979, 0
    %982 = vmatpush.msra.mxu0 0.0
    %983 = vmatpush.msra.mxu0 0.0
    %984 = vmatpush.msra.mxu0 0.0
    %985 = vmatpush.msra.mxu0 0.0
    %986 = vmatpush.msra.mxu0 0.0
    %987 = vmatpush.msra.mxu0 0.0
    %988 = vmatpush.msra.mxu0 0.0
    %989 = vmatpush.msra.mxu0 0.0
    %990 = vmatpush.msra.mxu0 0.0
    %991 = vmatpush.msra.mxu0 0.0
    %992 = vmatpush.msra.mxu0 0.0
    %993 = vmatpush.msra.mxu0 0.0
    %994 = vmatpush.msra.mxu0 %v222
    %995 = vmatpush.msra.mxu0 %v221
    %996 = vmatpush.msra.mxu0 %v220
    %997 = vmatpush.msra.mxu0 %v219
    %998 = vmatmul.f32.gmra.mxu0 %v980
    %v999 = vpop.f32.mrf.mxu0
    %v1000 = vadd.f32 %v223, %v999
    %1001 = vdwg.mxu0
    %v1002 = vsel %vm409, %v1000, -inf
    %1003 = vmax.xlane.f32.xlu0 %v1002
    %v1004 = vpop.xlane.xlu0 %1003
    %v1005 = vsub.f32 %v1000, %v1004
    %v1006 = vmul.f32 %v1005, 1.442695
    %v1007 = vpow.pop %v1006
    %v1008 = vsel %vm409, %v1007, 0.0
    %1009 = vadd.xlane.f32.xlu0 %v1008
    %v1010 = vpop.xlane.xlu0 %1009
    %v1011 = vlog2.pop %v1010
    %v1012 = vmul.f32 %v1011, 0.6931472
    %v1013 = vadd.f32 %v1004, %v1012
    %v1014 = vsub.f32 %v1000, %v1013
    %1015 = vst.msk [vmem:[#allocation17 + $0x3] sm:$0x1] %vm409, %v1014
    %1017 = vrot.lane.b32.xlu0 %v976, 32
    %v1018 = vpop.permute.xlu0 %1017
    %v1019 = vsel %vm228, %v1018, 0
    %1021 = vmatpush.msra.mxu0 0.0
    %1022 = vmatpush.msra.mxu0 0.0
    %1023 = vmatpush.msra.mxu0 0.0
    %1024 = vmatpush.msra.mxu0 0.0
    %1025 = vmatpush.msra.mxu0 0.0
    %1026 = vmatpush.msra.mxu0 0.0
    %1027 = vmatpush.msra.mxu0 0.0
    %1028 = vmatpush.msra.mxu0 0.0
    %1029 = vmatpush.msra.mxu0 0.0
    %1030 = vmatpush.msra.mxu0 0.0
    %1031 = vmatpush.msra.mxu0 0.0
    %1032 = vmatpush.msra.mxu0 0.0
    %1033 = vmatpush.msra.mxu0 %v209
    %1034 = vmatpush.msra.mxu0 %v208
    %1035 = vmatpush.msra.mxu0 %v207
    %1036 = vmatpush.msra.mxu0 %v206
    %1037 = vmatmul.f32.gmra.mxu0 %v1019
    %v1038 = vpop.f32.mrf.mxu0
    %v1039 = vadd.f32 0.0, %v1038
    %1040 = vdwg.mxu0
    %v1042 = vrot.slane %v1039, 4
    %v1044 = vadd.f32 %v204, %v1042
    %v1045 = vxor.u32 %v1044, 2147483648
    %v1046 = vmul.f32 %v1045, 1.442695
    %v1047 = vpow.pop %v1046
    %v1048 = vadd.f32 %v1047, 1.0
    %v1049 = vrcp.pop %v1048
    %v1050 = vmul.f32 %v1048, %v1049
    %v1051 = vsub.f32 1.0, %v1050
    %v1052 = vmul.f32 %v1049, %v1051
    %v1053 = vadd.f32 %v1049, %v1052
    %vm1054 = vweird.f32 %v1048
    %vm1055 = vweird.f32 %v1049
    %vm1056 = vmor %vm1054, %vm1055
    %v1057 = vsel %vm1056, %v1049, %v1053
    %v1058 = vand.u32 2147483647, %v1048
    %vm1059 = vcmp.eq.f32.partialorder %v1058, 8.507059e+37
    %v1060 = vand.u32 %v1048, 2147483648
    %v1061 = vor.u32 1.1754944e-38, %v1060
    %v1062 = vsel %vm1059, %v1061, %v1057
    %v1063 = vmul.f32 1.0, %v1062
    %v1064 = vtanh.pop %v1044
    %v1065 = vrot.slane %v970, 4
    %v1067 = vmul.f32 %v1063, %v1065
    %1069 = vrot.lane.b32.xlu0 %v1064, 64
    %v1070 = vpop.permute.xlu0 %1069
    %v1072 = vmul.f32 %v1063, %v1070
    %1074 = vrot.lane.b32.xlu0 %v1072, 32
    %v1075 = vpop.permute.xlu0 %1074
    %v1077 = vadd.f32 %v1067, %v1075
    %v1078 = vtanh.pop %v1077
    %1080 = vrot.lane.b32.xlu0 %v1078, 64
    %v1081 = vpop.permute.xlu0 %1080
    %v1083 = vmul.f32 %v1063, %v1081
    %v1085 = vrot.slane %v885, 3
    %1086 = vrot.lane.b32.xlu0 %v1085, 32
    %v1087 = vpop.permute.xlu0 %1086
    %v1088 = vsel %vm228, %v1087, 0
    %1090 = vmatpush.msra.mxu0 0.0
    %1091 = vmatpush.msra.mxu0 0.0
    %1092 = vmatpush.msra.mxu0 0.0
    %1093 = vmatpush.msra.mxu0 0.0
    %1094 = vmatpush.msra.mxu0 0.0
    %1095 = vmatpush.msra.mxu0 0.0
    %1096 = vmatpush.msra.mxu0 0.0
    %1097 = vmatpush.msra.mxu0 0.0
    %1098 = vmatpush.msra.mxu0 0.0
    %1099 = vmatpush.msra.mxu0 0.0
    %1100 = vmatpush.msra.mxu0 0.0
    %1101 = vmatpush.msra.mxu0 0.0
    %1102 = vmatpush.msra.mxu0 %v217
    %1103 = vmatpush.msra.mxu0 %v216
    %1104 = vmatpush.msra.mxu0 %v215
    %1105 = vmatpush.msra.mxu0 %v214
    %1106 = vmatmul.f32.gmra.mxu0 %v1088
    %v1107 = vpop.f32.mrf.mxu0
    %v1108 = vadd.f32 0.0, %v1107
    %1109 = vdwg.mxu0
    %v1111 = vrot.slane %v1077, 4
    %1112 = vrot.lane.b32.xlu0 %v1111, 96
    %v1113 = vpop.permute.xlu0 %1112
    %v1114 = vsel %vm228, %v1113, 0
    %1116 = vmatpush.msra.mxu0 0.0
    %1117 = vmatpush.msra.mxu0 0.0
    %1118 = vmatpush.msra.mxu0 0.0
    %1119 = vmatpush.msra.mxu0 0.0
    %1120 = vmatpush.msra.mxu0 0.0
    %1121 = vmatpush.msra.mxu0 0.0
    %1122 = vmatpush.msra.mxu0 0.0
    %1123 = vmatpush.msra.mxu0 0.0
    %1124 = vmatpush.msra.mxu0 0.0
    %1125 = vmatpush.msra.mxu0 0.0
    %1126 = vmatpush.msra.mxu0 0.0
    %1127 = vmatpush.msra.mxu0 0.0
    %1128 = vmatpush.msra.mxu0 %v213
    %1129 = vmatpush.msra.mxu0 %v212
    %1130 = vmatpush.msra.mxu0 %v211
    %1131 = vmatpush.msra.mxu0 %v210
    %1132 = vmatmul.f32.gmra.mxu0 %v1114
    %v1133 = vpop.f32.mrf.mxu0
    %v1134 = vadd.f32 %v1108, %v1133
    %1135 = vdwg.mxu0
    %v1136 = vadd.f32 %v1134, %v218
    %v1137 = vxor.u32 %v1136, 2147483648
    %v1138 = vmul.f32 %v1137, 1.442695
    %v1139 = vpow.pop %v1138
    %v1140 = vadd.f32 %v1139, 1.0
    %v1141 = vrcp.pop %v1140
    %v1142 = vmul.f32 %v1140, %v1141
    %v1143 = vsub.f32 1.0, %v1142
    %v1144 = vmul.f32 %v1141, %v1143
    %v1145 = vadd.f32 %v1141, %v1144
    %vm1146 = vweird.f32 %v1140
    %vm1147 = vweird.f32 %v1141
    %vm1148 = vmor %vm1146, %vm1147
    %v1149 = vsel %vm1148, %v1141, %v1145
    %v1150 = vand.u32 2147483647, %v1140
    %vm1151 = vcmp.eq.f32.partialorder %v1150, 8.507059e+37
    %v1152 = vand.u32 %v1140, 2147483648
    %v1153 = vor.u32 1.1754944e-38, %v1152
    %v1154 = vsel %vm1151, %v1153, %v1149
    %v1155 = vmul.f32 1.0, %v1154
    %v1156 = vtanh.pop %v1136
    %v1158 = vmul.f32 %v1155, %v913
    %1160 = vrot.lane.b32.xlu0 %v1156, 64
    %v1161 = vpop.permute.xlu0 %1160
    %v1163 = vmul.f32 %v1155, %v1161
    %1165 = vrot.lane.b32.xlu0 %v1163, 32
    %v1166 = vpop.permute.xlu0 %1165
    %v1168 = vadd.f32 %v1158, %v1166
    %v1169 = vtanh.pop %v1168
    %1171 = vrot.lane.b32.xlu0 %v1169, 64
    %v1172 = vpop.permute.xlu0 %1171
    %v1174 = vmul.f32 %v1155, %v1172
    %1176 = vrot.lane.b32.xlu0 %v1168, 96
    %v1177 = vpop.permute.xlu0 %1176
    %v1178 = vsel %vm228, %v1177, 0
    %1180 = vmatpush.msra.mxu0 0.0
    %1181 = vmatpush.msra.mxu0 0.0
    %1182 = vmatpush.msra.mxu0 0.0
    %1183 = vmatpush.msra.mxu0 0.0
    %1184 = vmatpush.msra.mxu0 0.0
    %1185 = vmatpush.msra.mxu0 0.0
    %1186 = vmatpush.msra.mxu0 0.0
    %1187 = vmatpush.msra.mxu0 0.0
    %1188 = vmatpush.msra.mxu0 0.0
    %1189 = vmatpush.msra.mxu0 0.0
    %1190 = vmatpush.msra.mxu0 0.0
    %1191 = vmatpush.msra.mxu0 0.0
    %1192 = vmatpush.msra.mxu0 %v222
    %1193 = vmatpush.msra.mxu0 %v221
    %1194 = vmatpush.msra.mxu0 %v220
    %1195 = vmatpush.msra.mxu0 %v219
    %1196 = vmatmul.f32.gmra.mxu0 %v1178
    %v1197 = vpop.f32.mrf.mxu0
    %v1198 = vadd.f32 %v223, %v1197
    %1199 = vdwg.mxu0
    %v1200 = vsel %vm409, %v1198, -inf
    %1201 = vmax.xlane.f32.xlu0 %v1200
    %v1202 = vpop.xlane.xlu0 %1201
    %v1203 = vsub.f32 %v1198, %v1202
    %v1204 = vmul.f32 %v1203, 1.442695
    %v1205 = vpow.pop %v1204
    %v1206 = vsel %vm409, %v1205, 0.0
    %1207 = vadd.xlane.f32.xlu0 %v1206
    %v1208 = vpop.xlane.xlu0 %1207
    %v1209 = vlog2.pop %v1208
    %v1210 = vmul.f32 %v1209, 0.6931472
    %v1211 = vadd.f32 %v1202, %v1210
    %v1212 = vsub.f32 %v1198, %v1211
    %1213 = vst.msk [vmem:[#allocation17 + $0x4] sm:$0x1] %vm409, %v1212
    %1215 = vrot.lane.b32.xlu0 %v1174, 32
    %v1216 = vpop.permute.xlu0 %1215
    %v1217 = vsel %vm228, %v1216, 0
    %1219 = vmatpush.msra.mxu0 0.0
    %1220 = vmatpush.msra.mxu0 0.0
    %1221 = vmatpush.msra.mxu0 0.0
    %1222 = vmatpush.msra.mxu0 0.0
    %1223 = vmatpush.msra.mxu0 0.0
    %1224 = vmatpush.msra.mxu0 0.0
    %1225 = vmatpush.msra.mxu0 0.0
    %1226 = vmatpush.msra.mxu0 0.0
    %1227 = vmatpush.msra.mxu0 0.0
    %1228 = vmatpush.msra.mxu0 0.0
    %1229 = vmatpush.msra.mxu0 0.0
    %1230 = vmatpush.msra.mxu0 0.0
    %1231 = vmatpush.msra.mxu0 %v209
    %1232 = vmatpush.msra.mxu0 %v208
    %1233 = vmatpush.msra.mxu0 %v207
    %1234 = vmatpush.msra.mxu0 %v206
    %1235 = vmatmul.f32.gmra.mxu0 %v1217
    %v1236 = vpop.f32.mrf.mxu0
    %v1237 = vadd.f32 0.0, %v1236
    %1238 = vdwg.mxu0
    %v1240 = vrot.slane %v1237, 3
    %v1242 = vadd.f32 %v204, %v1240
    %v1243 = vxor.u32 %v1242, 2147483648
    %v1244 = vmul.f32 %v1243, 1.442695
    %v1245 = vpow.pop %v1244
    %v1246 = vadd.f32 %v1245, 1.0
    %v1247 = vrcp.pop %v1246
    %v1248 = vmul.f32 %v1246, %v1247
    %v1249 = vsub.f32 1.0, %v1248
    %v1250 = vmul.f32 %v1247, %v1249
    %v1251 = vadd.f32 %v1247, %v1250
    %vm1252 = vweird.f32 %v1246
    %vm1253 = vweird.f32 %v1247
    %vm1254 = vmor %vm1252, %vm1253
    %v1255 = vsel %vm1254, %v1247, %v1251
    %v1256 = vand.u32 2147483647, %v1246
    %vm1257 = vcmp.eq.f32.partialorder %v1256, 8.507059e+37
    %v1258 = vand.u32 %v1246, 2147483648
    %v1259 = vor.u32 1.1754944e-38, %v1258
    %v1260 = vsel %vm1257, %v1259, %v1255
    %v1261 = vmul.f32 1.0, %v1260
    %v1262 = vtanh.pop %v1242
    %v1263 = vrot.slane %v1168, 3
    %v1265 = vmul.f32 %v1261, %v1263
    %1267 = vrot.lane.b32.xlu0 %v1262, 64
    %v1268 = vpop.permute.xlu0 %1267
    %v1270 = vmul.f32 %v1261, %v1268
    %1272 = vrot.lane.b32.xlu0 %v1270, 32
    %v1273 = vpop.permute.xlu0 %1272
    %v1275 = vadd.f32 %v1265, %v1273
    %v1276 = vtanh.pop %v1275
    %1278 = vrot.lane.b32.xlu0 %v1276, 64
    %v1279 = vpop.permute.xlu0 %1278
    %v1281 = vmul.f32 %v1261, %v1279
    %v1283 = vrot.slane %v1083, 4
    %1284 = vrot.lane.b32.xlu0 %v1283, 32
    %v1285 = vpop.permute.xlu0 %1284
    %v1286 = vsel %vm228, %v1285, 0
    %1288 = vmatpush.msra.mxu0 0.0
    %1289 = vmatpush.msra.mxu0 0.0
    %1290 = vmatpush.msra.mxu0 0.0
    %1291 = vmatpush.msra.mxu0 0.0
    %1292 = vmatpush.msra.mxu0 0.0
    %1293 = vmatpush.msra.mxu0 0.0
    %1294 = vmatpush.msra.mxu0 0.0
    %1295 = vmatpush.msra.mxu0 0.0
    %1296 = vmatpush.msra.mxu0 0.0
    %1297 = vmatpush.msra.mxu0 0.0
    %1298 = vmatpush.msra.mxu0 0.0
    %1299 = vmatpush.msra.mxu0 0.0
    %1300 = vmatpush.msra.mxu0 %v217
    %1301 = vmatpush.msra.mxu0 %v216
    %1302 = vmatpush.msra.mxu0 %v215
    %1303 = vmatpush.msra.mxu0 %v214
    %1304 = vmatmul.f32.gmra.mxu0 %v1286
    %v1305 = vpop.f32.mrf.mxu0
    %v1306 = vadd.f32 0.0, %v1305
    %1307 = vdwg.mxu0
    %v1309 = vrot.slane %v1275, 5
    %1310 = vrot.lane.b32.xlu0 %v1309, 96
    %v1311 = vpop.permute.xlu0 %1310
    %v1312 = vsel %vm228, %v1311, 0
    %1314 = vmatpush.msra.mxu0 0.0
    %1315 = vmatpush.msra.mxu0 0.0
    %1316 = vmatpush.msra.mxu0 0.0
    %1317 = vmatpush.msra.mxu0 0.0
    %1318 = vmatpush.msra.mxu0 0.0
    %1319 = vmatpush.msra.mxu0 0.0
    %1320 = vmatpush.msra.mxu0 0.0
    %1321 = vmatpush.msra.mxu0 0.0
    %1322 = vmatpush.msra.mxu0 0.0
    %1323 = vmatpush.msra.mxu0 0.0
    %1324 = vmatpush.msra.mxu0 0.0
    %1325 = vmatpush.msra.mxu0 0.0
    %1326 = vmatpush.msra.mxu0 %v213
    %1327 = vmatpush.msra.mxu0 %v212
    %1328 = vmatpush.msra.mxu0 %v211
    %1329 = vmatpush.msra.mxu0 %v210
    %1330 = vmatmul.f32.gmra.mxu0 %v1312
    %v1331 = vpop.f32.mrf.mxu0
    %v1332 = vadd.f32 %v1306, %v1331
    %1333 = vdwg.mxu0
    %v1334 = vadd.f32 %v1332, %v218
    %v1335 = vxor.u32 %v1334, 2147483648
    %v1336 = vmul.f32 %v1335, 1.442695
    %v1337 = vpow.pop %v1336
    %v1338 = vadd.f32 %v1337, 1.0
    %v1339 = vrcp.pop %v1338
    %v1340 = vmul.f32 %v1338, %v1339
    %v1341 = vsub.f32 1.0, %v1340
    %v1342 = vmul.f32 %v1339, %v1341
    %v1343 = vadd.f32 %v1339, %v1342
    %vm1344 = vweird.f32 %v1338
    %vm1345 = vweird.f32 %v1339
    %vm1346 = vmor %vm1344, %vm1345
    %v1347 = vsel %vm1346, %v1339, %v1343
    %v1348 = vand.u32 2147483647, %v1338
    %vm1349 = vcmp.eq.f32.partialorder %v1348, 8.507059e+37
    %v1350 = vand.u32 %v1338, 2147483648
    %v1351 = vor.u32 1.1754944e-38, %v1350
    %v1352 = vsel %vm1349, %v1351, %v1347
    %v1353 = vmul.f32 1.0, %v1352
    %v1354 = vtanh.pop %v1334
    %v1356 = vmul.f32 %v1353, %v1111
    %1358 = vrot.lane.b32.xlu0 %v1354, 64
    %v1359 = vpop.permute.xlu0 %1358
    %v1361 = vmul.f32 %v1353, %v1359
    %1363 = vrot.lane.b32.xlu0 %v1361, 32
    %v1364 = vpop.permute.xlu0 %1363
    %v1366 = vadd.f32 %v1356, %v1364
    %v1367 = vtanh.pop %v1366
    %1369 = vrot.lane.b32.xlu0 %v1367, 64
    %v1370 = vpop.permute.xlu0 %1369
    %v1372 = vmul.f32 %v1353, %v1370
    %1374 = vrot.lane.b32.xlu0 %v1366, 96
    %v1375 = vpop.permute.xlu0 %1374
    %v1376 = vsel %vm228, %v1375, 0
    %1378 = vmatpush.msra.mxu0 0.0
    %1379 = vmatpush.msra.mxu0 0.0
    %1380 = vmatpush.msra.mxu0 0.0
    %1381 = vmatpush.msra.mxu0 0.0
    %1382 = vmatpush.msra.mxu0 0.0
    %1383 = vmatpush.msra.mxu0 0.0
    %1384 = vmatpush.msra.mxu0 0.0
    %1385 = vmatpush.msra.mxu0 0.0
    %1386 = vmatpush.msra.mxu0 0.0
    %1387 = vmatpush.msra.mxu0 0.0
    %1388 = vmatpush.msra.mxu0 0.0
    %1389 = vmatpush.msra.mxu0 0.0
    %1390 = vmatpush.msra.mxu0 %v222
    %1391 = vmatpush.msra.mxu0 %v221
    %1392 = vmatpush.msra.mxu0 %v220
    %1393 = vmatpush.msra.mxu0 %v219
    %1394 = vmatmul.f32.gmra.mxu0 %v1376
    %v1395 = vpop.f32.mrf.mxu0
    %v1396 = vadd.f32 %v223, %v1395
    %1397 = vdwg.mxu0
    %v1398 = vsel %vm409, %v1396, -inf
    %1399 = vmax.xlane.f32.xlu0 %v1398
    %v1400 = vpop.xlane.xlu0 %1399
    %v1401 = vsub.f32 %v1396, %v1400
    %v1402 = vmul.f32 %v1401, 1.442695
    %v1403 = vpow.pop %v1402
    %v1404 = vsel %vm409, %v1403, 0.0
    %1405 = vadd.xlane.f32.xlu0 %v1404
    %v1406 = vpop.xlane.xlu0 %1405
    %v1407 = vlog2.pop %v1406
    %v1408 = vmul.f32 %v1407, 0.6931472
    %v1409 = vadd.f32 %v1400, %v1408
    %v1410 = vsub.f32 %v1396, %v1409
    %1411 = vst.msk [vmem:[#allocation17 + $0x5] sm:$0x1] %vm409, %v1410
    %1413 = vrot.lane.b32.xlu0 %v1372, 32
    %v1414 = vpop.permute.xlu0 %1413
    %v1415 = vsel %vm228, %v1414, 0
    %1417 = vmatpush.msra.mxu0 0.0
    %1418 = vmatpush.msra.mxu0 0.0
    %1419 = vmatpush.msra.mxu0 0.0
    %1420 = vmatpush.msra.mxu0 0.0
    %1421 = vmatpush.msra.mxu0 0.0
    %1422 = vmatpush.msra.mxu0 0.0
    %1423 = vmatpush.msra.mxu0 0.0
    %1424 = vmatpush.msra.mxu0 0.0
    %1425 = vmatpush.msra.mxu0 0.0
    %1426 = vmatpush.msra.mxu0 0.0
    %1427 = vmatpush.msra.mxu0 0.0
    %1428 = vmatpush.msra.mxu0 0.0
    %1429 = vmatpush.msra.mxu0 %v209
    %1430 = vmatpush.msra.mxu0 %v208
    %1431 = vmatpush.msra.mxu0 %v207
    %1432 = vmatpush.msra.mxu0 %v206
    %1433 = vmatmul.f32.gmra.mxu0 %v1415
    %v1434 = vpop.f32.mrf.mxu0
    %v1435 = vadd.f32 0.0, %v1434
    %1436 = vdwg.mxu0
    %v1438 = vrot.slane %v1435, 2
    %v1440 = vadd.f32 %v204, %v1438
    %v1441 = vxor.u32 %v1440, 2147483648
    %v1442 = vmul.f32 %v1441, 1.442695
    %v1443 = vpow.pop %v1442
    %v1444 = vadd.f32 %v1443, 1.0
    %v1445 = vrcp.pop %v1444
    %v1446 = vmul.f32 %v1444, %v1445
    %v1447 = vsub.f32 1.0, %v1446
    %v1448 = vmul.f32 %v1445, %v1447
    %v1449 = vadd.f32 %v1445, %v1448
    %vm1450 = vweird.f32 %v1444
    %vm1451 = vweird.f32 %v1445
    %vm1452 = vmor %vm1450, %vm1451
    %v1453 = vsel %vm1452, %v1445, %v1449
    %v1454 = vand.u32 2147483647, %v1444
    %vm1455 = vcmp.eq.f32.partialorder %v1454, 8.507059e+37
    %v1456 = vand.u32 %v1444, 2147483648
    %v1457 = vor.u32 1.1754944e-38, %v1456
    %v1458 = vsel %vm1455, %v1457, %v1453
    %v1459 = vmul.f32 1.0, %v1458
    %v1460 = vtanh.pop %v1440
    %v1461 = vrot.slane %v1366, 2
    %v1463 = vmul.f32 %v1459, %v1461
    %1465 = vrot.lane.b32.xlu0 %v1460, 64
    %v1466 = vpop.permute.xlu0 %1465
    %v1468 = vmul.f32 %v1459, %v1466
    %1470 = vrot.lane.b32.xlu0 %v1468, 32
    %v1471 = vpop.permute.xlu0 %1470
    %v1473 = vadd.f32 %v1463, %v1471
    %v1474 = vtanh.pop %v1473
    %1476 = vrot.lane.b32.xlu0 %v1474, 64
    %v1477 = vpop.permute.xlu0 %1476
    %v1479 = vmul.f32 %v1459, %v1477
    %v1481 = vrot.slane %v1281, 5
    %1482 = vrot.lane.b32.xlu0 %v1481, 32
    %v1483 = vpop.permute.xlu0 %1482
    %v1484 = vsel %vm228, %v1483, 0
    %1486 = vmatpush.msra.mxu0 0.0
    %1487 = vmatpush.msra.mxu0 0.0
    %1488 = vmatpush.msra.mxu0 0.0
    %1489 = vmatpush.msra.mxu0 0.0
    %1490 = vmatpush.msra.mxu0 0.0
    %1491 = vmatpush.msra.mxu0 0.0
    %1492 = vmatpush.msra.mxu0 0.0
    %1493 = vmatpush.msra.mxu0 0.0
    %1494 = vmatpush.msra.mxu0 0.0
    %1495 = vmatpush.msra.mxu0 0.0
    %1496 = vmatpush.msra.mxu0 0.0
    %1497 = vmatpush.msra.mxu0 0.0
    %1498 = vmatpush.msra.mxu0 %v217
    %1499 = vmatpush.msra.mxu0 %v216
    %1500 = vmatpush.msra.mxu0 %v215
    %1501 = vmatpush.msra.mxu0 %v214
    %1502 = vmatmul.f32.gmra.mxu0 %v1484
    %v1503 = vpop.f32.mrf.mxu0
    %v1504 = vadd.f32 0.0, %v1503
    %1505 = vdwg.mxu0
    %v1507 = vrot.slane %v1473, 6
    %1508 = vrot.lane.b32.xlu0 %v1507, 96
    %v1509 = vpop.permute.xlu0 %1508
    %v1510 = vsel %vm228, %v1509, 0
    %1512 = vmatpush.msra.mxu0 0.0
    %1513 = vmatpush.msra.mxu0 0.0
    %1514 = vmatpush.msra.mxu0 0.0
    %1515 = vmatpush.msra.mxu0 0.0
    %1516 = vmatpush.msra.mxu0 0.0
    %1517 = vmatpush.msra.mxu0 0.0
    %1518 = vmatpush.msra.mxu0 0.0
    %1519 = vmatpush.msra.mxu0 0.0
    %1520 = vmatpush.msra.mxu0 0.0
    %1521 = vmatpush.msra.mxu0 0.0
    %1522 = vmatpush.msra.mxu0 0.0
    %1523 = vmatpush.msra.mxu0 0.0
    %1524 = vmatpush.msra.mxu0 %v213
    %1525 = vmatpush.msra.mxu0 %v212
    %1526 = vmatpush.msra.mxu0 %v211
    %1527 = vmatpush.msra.mxu0 %v210
    %1528 = vmatmul.f32.gmra.mxu0 %v1510
    %v1529 = vpop.f32.mrf.mxu0
    %v1530 = vadd.f32 %v1504, %v1529
    %1531 = vdwg.mxu0
    %v1532 = vadd.f32 %v1530, %v218
    %v1533 = vxor.u32 %v1532, 2147483648
    %v1534 = vmul.f32 %v1533, 1.442695
    %v1535 = vpow.pop %v1534
    %v1536 = vadd.f32 %v1535, 1.0
    %v1537 = vrcp.pop %v1536
    %v1538 = vmul.f32 %v1536, %v1537
    %v1539 = vsub.f32 1.0, %v1538
    %v1540 = vmul.f32 %v1537, %v1539
    %v1541 = vadd.f32 %v1537, %v1540
    %vm1542 = vweird.f32 %v1536
    %vm1543 = vweird.f32 %v1537
    %vm1544 = vmor %vm1542, %vm1543
    %v1545 = vsel %vm1544, %v1537, %v1541
    %v1546 = vand.u32 2147483647, %v1536
    %vm1547 = vcmp.eq.f32.partialorder %v1546, 8.507059e+37
    %v1548 = vand.u32 %v1536, 2147483648
    %v1549 = vor.u32 1.1754944e-38, %v1548
    %v1550 = vsel %vm1547, %v1549, %v1545
    %v1551 = vmul.f32 1.0, %v1550
    %v1552 = vtanh.pop %v1532
    %v1554 = vmul.f32 %v1551, %v1309
    %1556 = vrot.lane.b32.xlu0 %v1552, 64
    %v1557 = vpop.permute.xlu0 %1556
    %v1559 = vmul.f32 %v1551, %v1557
    %1561 = vrot.lane.b32.xlu0 %v1559, 32
    %v1562 = vpop.permute.xlu0 %1561
    %v1564 = vadd.f32 %v1554, %v1562
    %v1565 = vtanh.pop %v1564
    %1567 = vrot.lane.b32.xlu0 %v1565, 64
    %v1568 = vpop.permute.xlu0 %1567
    %v1570 = vmul.f32 %v1551, %v1568
    %1572 = vrot.lane.b32.xlu0 %v1564, 96
    %v1573 = vpop.permute.xlu0 %1572
    %v1574 = vsel %vm228, %v1573, 0
    %1576 = vmatpush.msra.mxu0 0.0
    %1577 = vmatpush.msra.mxu0 0.0
    %1578 = vmatpush.msra.mxu0 0.0
    %1579 = vmatpush.msra.mxu0 0.0
    %1580 = vmatpush.msra.mxu0 0.0
    %1581 = vmatpush.msra.mxu0 0.0
    %1582 = vmatpush.msra.mxu0 0.0
    %1583 = vmatpush.msra.mxu0 0.0
    %1584 = vmatpush.msra.mxu0 0.0
    %1585 = vmatpush.msra.mxu0 0.0
    %1586 = vmatpush.msra.mxu0 0.0
    %1587 = vmatpush.msra.mxu0 0.0
    %1588 = vmatpush.msra.mxu0 %v222
    %1589 = vmatpush.msra.mxu0 %v221
    %1590 = vmatpush.msra.mxu0 %v220
    %1591 = vmatpush.msra.mxu0 %v219
    %1592 = vmatmul.f32.gmra.mxu0 %v1574
    %v1593 = vpop.f32.mrf.mxu0
    %v1594 = vadd.f32 %v223, %v1593
    %1595 = vdwg.mxu0
    %v1596 = vsel %vm409, %v1594, -inf
    %1597 = vmax.xlane.f32.xlu0 %v1596
    %v1598 = vpop.xlane.xlu0 %1597
    %v1599 = vsub.f32 %v1594, %v1598
    %v1600 = vmul.f32 %v1599, 1.442695
    %v1601 = vpow.pop %v1600
    %v1602 = vsel %vm409, %v1601, 0.0
    %1603 = vadd.xlane.f32.xlu0 %v1602
    %v1604 = vpop.xlane.xlu0 %1603
    %v1605 = vlog2.pop %v1604
    %v1606 = vmul.f32 %v1605, 0.6931472
    %v1607 = vadd.f32 %v1598, %v1606
    %v1608 = vsub.f32 %v1594, %v1607
    %1609 = vst.msk [vmem:[#allocation17 + $0x6] sm:$0x1] %vm409, %v1608
    %1611 = vrot.lane.b32.xlu0 %v1570, 32
    %v1612 = vpop.permute.xlu0 %1611
    %v1613 = vsel %vm228, %v1612, 0
    %1615 = vmatpush.msra.mxu0 0.0
    %1616 = vmatpush.msra.mxu0 0.0
    %1617 = vmatpush.msra.mxu0 0.0
    %1618 = vmatpush.msra.mxu0 0.0
    %1619 = vmatpush.msra.mxu0 0.0
    %1620 = vmatpush.msra.mxu0 0.0
    %1621 = vmatpush.msra.mxu0 0.0
    %1622 = vmatpush.msra.mxu0 0.0
    %1623 = vmatpush.msra.mxu0 0.0
    %1624 = vmatpush.msra.mxu0 0.0
    %1625 = vmatpush.msra.mxu0 0.0
    %1626 = vmatpush.msra.mxu0 0.0
    %1627 = vmatpush.msra.mxu0 %v209
    %1628 = vmatpush.msra.mxu0 %v208
    %1629 = vmatpush.msra.mxu0 %v207
    %1630 = vmatpush.msra.mxu0 %v206
    %1631 = vmatmul.f32.gmra.mxu0 %v1613
    %v1632 = vpop.f32.mrf.mxu0
    %v1633 = vadd.f32 0.0, %v1632
    %1634 = vdwg.mxu0
    %v1636 = vrot.slane %v1633, 1
    %v1638 = vadd.f32 %v204, %v1636
    %v1639 = vxor.u32 %v1638, 2147483648
    %v1640 = vmul.f32 %v1639, 1.442695
    %v1641 = vpow.pop %v1640
    %v1642 = vadd.f32 %v1641, 1.0
    %v1643 = vrcp.pop %v1642
    %v1644 = vmul.f32 %v1642, %v1643
    %v1645 = vsub.f32 1.0, %v1644
    %v1646 = vmul.f32 %v1643, %v1645
    %v1647 = vadd.f32 %v1643, %v1646
    %vm1648 = vweird.f32 %v1642
    %vm1649 = vweird.f32 %v1643
    %vm1650 = vmor %vm1648, %vm1649
    %v1651 = vsel %vm1650, %v1643, %v1647
    %v1652 = vand.u32 2147483647, %v1642
    %vm1653 = vcmp.eq.f32.partialorder %v1652, 8.507059e+37
    %v1654 = vand.u32 %v1642, 2147483648
    %v1655 = vor.u32 1.1754944e-38, %v1654
    %v1656 = vsel %vm1653, %v1655, %v1651
    %v1657 = vmul.f32 1.0, %v1656
    %v1658 = vtanh.pop %v1638
    %v1659 = vrot.slane %v1564, 1
    %v1661 = vmul.f32 %v1657, %v1659
    %1663 = vrot.lane.b32.xlu0 %v1658, 64
    %v1664 = vpop.permute.xlu0 %1663
    %v1666 = vmul.f32 %v1657, %v1664
    %1668 = vrot.lane.b32.xlu0 %v1666, 32
    %v1669 = vpop.permute.xlu0 %1668
    %v1671 = vadd.f32 %v1661, %v1669
    %v1672 = vtanh.pop %v1671
    %1674 = vrot.lane.b32.xlu0 %v1672, 64
    %v1675 = vpop.permute.xlu0 %1674
    %v1677 = vmul.f32 %v1657, %v1675
    %v1679 = vrot.slane %v1479, 6
    %1680 = vrot.lane.b32.xlu0 %v1679, 32
    %v1681 = vpop.permute.xlu0 %1680
    %v1682 = vsel %vm228, %v1681, 0
    %1684 = vmatpush.msra.mxu0 0.0
    %1685 = vmatpush.msra.mxu0 0.0
    %1686 = vmatpush.msra.mxu0 0.0
    %1687 = vmatpush.msra.mxu0 0.0
    %1688 = vmatpush.msra.mxu0 0.0
    %1689 = vmatpush.msra.mxu0 0.0
    %1690 = vmatpush.msra.mxu0 0.0
    %1691 = vmatpush.msra.mxu0 0.0
    %1692 = vmatpush.msra.mxu0 0.0
    %1693 = vmatpush.msra.mxu0 0.0
    %1694 = vmatpush.msra.mxu0 0.0
    %1695 = vmatpush.msra.mxu0 0.0
    %1696 = vmatpush.msra.mxu0 %v217
    %1697 = vmatpush.msra.mxu0 %v216
    %1698 = vmatpush.msra.mxu0 %v215
    %1699 = vmatpush.msra.mxu0 %v214
    %1700 = vmatmul.f32.gmra.mxu0 %v1682
    %v1701 = vpop.f32.mrf.mxu0
    %v1702 = vadd.f32 0.0, %v1701
    %1703 = vdwg.mxu0
    %v1705 = vrot.slane %v1671, 7
    %1706 = vrot.lane.b32.xlu0 %v1705, 96
    %v1707 = vpop.permute.xlu0 %1706
    %v1708 = vsel %vm228, %v1707, 0
    %1710 = vmatpush.msra.mxu0 0.0
    %1711 = vmatpush.msra.mxu0 0.0
    %1712 = vmatpush.msra.mxu0 0.0
    %1713 = vmatpush.msra.mxu0 0.0
    %1714 = vmatpush.msra.mxu0 0.0
    %1715 = vmatpush.msra.mxu0 0.0
    %1716 = vmatpush.msra.mxu0 0.0
    %1717 = vmatpush.msra.mxu0 0.0
    %1718 = vmatpush.msra.mxu0 0.0
    %1719 = vmatpush.msra.mxu0 0.0
    %1720 = vmatpush.msra.mxu0 0.0
    %1721 = vmatpush.msra.mxu0 0.0
    %1722 = vmatpush.msra.mxu0 %v213
    %1723 = vmatpush.msra.mxu0 %v212
    %1724 = vmatpush.msra.mxu0 %v211
    %1725 = vmatpush.msra.mxu0 %v210
    %1726 = vmatmul.f32.gmra.mxu0 %v1708
    %v1727 = vpop.f32.mrf.mxu0
    %v1728 = vadd.f32 %v1702, %v1727
    %1729 = vdwg.mxu0
    %v1730 = vadd.f32 %v1728, %v218
    %v1731 = vxor.u32 %v1730, 2147483648
    %v1732 = vmul.f32 %v1731, 1.442695
    %v1733 = vpow.pop %v1732
    %v1734 = vadd.f32 %v1733, 1.0
    %v1735 = vrcp.pop %v1734
    %v1736 = vmul.f32 %v1734, %v1735
    %v1737 = vsub.f32 1.0, %v1736
    %v1738 = vmul.f32 %v1735, %v1737
    %v1739 = vadd.f32 %v1735, %v1738
    %vm1740 = vweird.f32 %v1734
    %vm1741 = vweird.f32 %v1735
    %vm1742 = vmor %vm1740, %vm1741
    %v1743 = vsel %vm1742, %v1735, %v1739
    %v1744 = vand.u32 2147483647, %v1734
    %vm1745 = vcmp.eq.f32.partialorder %v1744, 8.507059e+37
    %v1746 = vand.u32 %v1734, 2147483648
    %v1747 = vor.u32 1.1754944e-38, %v1746
    %v1748 = vsel %vm1745, %v1747, %v1743
    %v1749 = vmul.f32 1.0, %v1748
    %v1750 = vtanh.pop %v1730
    %v1752 = vmul.f32 %v1749, %v1507
    %1754 = vrot.lane.b32.xlu0 %v1750, 64
    %v1755 = vpop.permute.xlu0 %1754
    %v1757 = vmul.f32 %v1749, %v1755
    %1759 = vrot.lane.b32.xlu0 %v1757, 32
    %v1760 = vpop.permute.xlu0 %1759
    %v1762 = vadd.f32 %v1752, %v1760
    %v1763 = vtanh.pop %v1762
    %1765 = vrot.lane.b32.xlu0 %v1763, 64
    %v1766 = vpop.permute.xlu0 %1765
    %v1768 = vmul.f32 %v1749, %v1766
    %1770 = vrot.lane.b32.xlu0 %v1762, 96
    %v1771 = vpop.permute.xlu0 %1770
    %v1772 = vsel %vm228, %v1771, 0
    %1774 = vmatpush.msra.mxu0 0.0
    %1775 = vmatpush.msra.mxu0 0.0
    %1776 = vmatpush.msra.mxu0 0.0
    %1777 = vmatpush.msra.mxu0 0.0
    %1778 = vmatpush.msra.mxu0 0.0
    %1779 = vmatpush.msra.mxu0 0.0
    %1780 = vmatpush.msra.mxu0 0.0
    %1781 = vmatpush.msra.mxu0 0.0
    %1782 = vmatpush.msra.mxu0 0.0
    %1783 = vmatpush.msra.mxu0 0.0
    %1784 = vmatpush.msra.mxu0 0.0
    %1785 = vmatpush.msra.mxu0 0.0
    %1786 = vmatpush.msra.mxu0 %v222
    %1787 = vmatpush.msra.mxu0 %v221
    %1788 = vmatpush.msra.mxu0 %v220
    %1789 = vmatpush.msra.mxu0 %v219
    %1790 = vmatmul.f32.gmra.mxu0 %v1772
    %v1791 = vpop.f32.mrf.mxu0
    %v1792 = vadd.f32 %v223, %v1791
    %1793 = vdwg.mxu0
    %v1794 = vsel %vm409, %v1792, -inf
    %1795 = vmax.xlane.f32.xlu0 %v1794
    %v1796 = vpop.xlane.xlu0 %1795
    %v1797 = vsub.f32 %v1792, %v1796
    %v1798 = vmul.f32 %v1797, 1.442695
    %v1799 = vpow.pop %v1798
    %v1800 = vsel %vm409, %v1799, 0.0
    %1801 = vadd.xlane.f32.xlu0 %v1800
    %v1802 = vpop.xlane.xlu0 %1801
    %v1803 = vlog2.pop %v1802
    %v1804 = vmul.f32 %v1803, 0.6931472
    %v1805 = vadd.f32 %v1796, %v1804
    %v1806 = vsub.f32 %v1792, %v1805
    %1807 = vst.msk [vmem:[#allocation17 + $0x7] sm:$0x1] %vm409, %v1806
    %1809 = vrot.lane.b32.xlu0 %v1677, 32
    %v1810 = vpop.permute.xlu0 %1809
    %vm1812 = vcmask 261127
    %1813 = vst.msk [vmem:[#allocation18 - $0x7] sm:$0x80] %vm1812, %v1810
    %1815 = vrot.lane.b32.xlu0 %v1768, 32
    %v1816 = vpop.permute.xlu0 %1815
    %vm1818 = vcmask 253952
    %1819 = vst.msk [vmem:[#allocation18 + $0x1] sm:$0x1] %vm1818, %v1816
    %1820 = vrot.lane.b32.xlu0 %v1671, 96
    %v1821 = vpop.permute.xlu0 %1820
    %1823 = vst.msk [vmem:[#allocation20 - $0x7] sm:$0x80] %vm1812, %v1821
    %1825 = vst.msk [vmem:[#allocation20 + $0x1] sm:$0x1] %vm1818, %v1771
    // Predicated region
    $region82: #{lstm_forward_seq.1} parent=1 // pred_check
      _
    $region83: #{lstm_forward_seq.1} parent=1 // pred_check_branch
      %1827 = sbr.rel (0) target = $region85
    $region84: #{lstm_forward_seq.1} parent=1 // pred_region
      %1829 = vsyncadd [#allocation4], 0
      %s1831 = sshll.u32 [#allocation17], 4
      %s1832 = int_to_ptr.vmem [resolvable:$true] %s1831
      %s1833 = sshll.u32 %s11, 4
      %s1834 = int_to_ptr.hbm [resolvable:$true] %s1833
      %1836 = dma.vmem_to_hbm [thread:$0]  %s1832, 128, %s1834, [#allocation4]
    $region85: #{lstm_forward_seq.1} parent=1 // pred_fallthru
      _
    // Predicated region
    $region86: #{lstm_forward_seq.1} parent=1 // pred_check
      _
    $region87: #{lstm_forward_seq.1} parent=1 // pred_check_branch
      %1838 = sbr.rel (0) target = $region89
    $region88: #{lstm_forward_seq.1} parent=1 // pred_region
      %1840 = vsyncadd [#allocation19], 0
      %s1842 = sshll.u32 [#allocation18], 4
      %s1843 = int_to_ptr.vmem [resolvable:$true] %s1842
      %s1844 = sshll.u32 %s12, 4
      %s1845 = int_to_ptr.hbm [resolvable:$true] %s1844
      %1847 = dma.vmem_to_hbm [thread:$0]  %s1843, 32, %s1845, [#allocation19]
    $region89: #{lstm_forward_seq.1} parent=1 // pred_fallthru
      _
    // Predicated region
    $region90: #{lstm_forward_seq.1} parent=1 // pred_check
      _
    $region91: #{lstm_forward_seq.1} parent=1 // pred_check_branch
      %1849 = sbr.rel (0) target = $region93
    $region92: #{lstm_forward_seq.1} parent=1 // pred_region
      %1851 = vsyncadd [#allocation19], 0
      %s1853 = sshll.u32 [#allocation20], 4
      %s1854 = int_to_ptr.vmem [resolvable:$true] %s1853
      %s1855 = sshll.u32 %s13, 4
      %s1856 = int_to_ptr.hbm [resolvable:$true] %s1855
      %1858 = dma.vmem_to_hbm [thread:$0]  %s1854, 32, %s1856, [#allocation19]
    $region93: #{lstm_forward_seq.1} parent=1 // pred_fallthru
      _
    // Predicated region
    $region94: #{lstm_forward_seq.1} parent=1 // pred_check
      _
    $region95: #{lstm_forward_seq.1} parent=1 // pred_check_branch
      %1860 = sbr.rel (0) target = $region97
    $region96: #{lstm_forward_seq.1} parent=1 // pred_region
      %1862 = dma.done [#allocation4], 128
    $region97: #{lstm_forward_seq.1} parent=1 // pred_fallthru
      _
    // Predicated region
    $region98: #{lstm_forward_seq.1} parent=1 // pred_check
      _
    $region99: #{lstm_forward_seq.1} parent=1 // pred_check_branch
      %1864 = sbr.rel (0) target = $region101
    $region100: #{lstm_forward_seq.1} parent=1 // pred_region
      %1866 = dma.done [#allocation19], 32
    $region101: #{lstm_forward_seq.1} parent=1 // pred_fallthru
      _
    // Predicated region
    $region102: #{lstm_forward_seq.1} parent=1 // pred_check
      _
    $region103: #{lstm_forward_seq.1} parent=1 // pred_check_branch
      %1868 = sbr.rel (0) target = $region105
    $region104: #{lstm_forward_seq.1} parent=1 // pred_region
      %1870 = dma.done [#allocation19], 32
    $region105: #{lstm_forward_seq.1} parent=1 // pred_fallthru
      _
    %1871 = vsyncpa [#allocation3], 1
    %1872 = vsyncpa [#allocation6], 1
    %1873 = vsyncpa [#allocation9], 1
    %1874 = vsyncpa [#allocation12], 1
    %1875 = vsyncpa [#allocation15], 1
    %1876 = vsyncpa [#allocation4], 1
    %1877 = vsyncpa [#allocation19], 1

</llo_original>
